<compile_context>
chip_gen: v6e
topology: v6e:2x2x1
jax: 0.10.0
libtpu: 0.0.40
codegen_flags: <defaults>
</compile_context>

<pallas_src>
import functools

import jax
import jax.numpy as jnp
from jax.experimental import pallas as pl
from jax.experimental.pallas import tpu as pltpu


def _round_up(x, m):
    return (x + m - 1) // m * m


def _conv_pool_kernel(x_ref, w_ref, p_ref, o_ref, scr_ref, *,
                      W, Cin3, Cout, Cp, TH, Wp):
    """One (batch image, row tile) per grid step.  t is the INNER, sequential axis.

    x_ref  : (1, TH, Wp, 3*Cin) bf16  kh-folded, zero-padded input rows of this
             tile.  Row i holds [row i-1 | row i | row i+1] of the (1-row /
             1-col zero padded) image concatenated on channels; Wp = padded
             width (>= W+2, multiple of 8).
    w_ref  : (3*Cin, 3*Cp) bf16  conv weight, K = kh*Cin+ci, N = kw*Cp + o
             (out-channels zero-padded to Cp = round_up(Cout, 128)).
    p_ref  : (4, Cp) f32  rows = [bias, gamma, beta, channel-mask].
    o_ref  : (1, TH//2, W//2, Cp) f32 pooled output tile (padded channels).
    scr_ref: (TH+2, W+8, Cp) f32 persistent pooling scratch.
             row 0        : previous tile's last LN row (carry) / -inf at t==0
             rows 1..TH   : this tile's LN rows
             row TH+1     : phantom, kept at -inf (never selected)
             col 7        : -inf left pool-pad column (cols 0..6 unused)
             cols 8..W+7  : data columns
    """
    THo = TH // 2
    Wo = W // 2
    t = pl.program_id(1)

    # ---- pooling-scratch bookkeeping (before the data rows are rewritten) ---
    @pl.when(t == 0)
    def _():
        # Fresh image: top pool-pad row, phantom bottom row, left pad column.
        # These persist across the whole t sweep (data stores never touch them).
        scr_ref[0:1, :, :] = jnp.full((1, W + 8, Cp), -jnp.inf, jnp.float32)
        scr_ref[TH + 1:TH + 2, :, :] = jnp.full((1, W + 8, Cp), -jnp.inf,
                                                jnp.float32)
        scr_ref[:, 7:8, :] = jnp.full((TH + 2, 1, Cp), -jnp.inf, jnp.float32)

    @pl.when(t > 0)
    def _():
        # Carry: the previous tile's last conv+LN row (still sitting in scr row
        # TH from the previous grid step) becomes this tile's row "-1".
        scr_ref[0:1, 8:8 + W, :] = scr_ref[TH:TH + 1, 8:8 + W, :]

    # ---- conv 3x3 / stride 1 / pad 1: ONE MXU matmul ------------------------
    # kh lives in K (folded in the wrapper), kw lives in N (3 taps side by side).
    xflat = x_ref[0].reshape(TH * Wp, Cin3)                    # bf16, free reshape
    acc = jnp.dot(xflat, w_ref[...], preferred_element_type=jnp.float32)
    acc = acc.reshape(TH, Wp, 3 * Cp)

    # Combine the three kw taps by shifting the output columns; each tap's
    # channel block starts at a 128-aligned lane offset (0, Cp, 2*Cp).
    y = (acc[:, 0:W, 0:Cp]
         + acc[:, 1:W + 1, Cp:2 * Cp]
         + acc[:, 2:W + 2, 2 * Cp:3 * Cp]) + p_ref[0]          # (TH, W, Cp)

    # ---- LayerNorm over the Cout real channels (eps=1e-6), two-pass ---------
    # Padded lanes of y are exactly 0 (zero weight columns, zero bias), so the
    # sum over all Cp lanes equals the sum over the real channels; the centered
    # term is masked so padded lanes don't pollute the variance.
    inv_c = 1.0 / Cout
    mean = jnp.sum(y, axis=-1, keepdims=True) * inv_c
    yc = (y - mean) * p_ref[3]                                  # mask pad lanes
    var = jnp.sum(yc * yc, axis=-1, keepdims=True) * inv_c
    yn = yc * jax.lax.rsqrt(var + 1e-6) * p_ref[1] + p_ref[2]   # (TH, W, Cp)

    scr_ref[1:TH + 1, 8:8 + W, :] = yn

    # ---- MaxPool 3x3 / stride 2 / pad 1 --------------------------------------
    # width: windows {2q-1, 2q, 2q+1} via three stride-2 sublane reads
    # (col 7 plays pool column -1; the right pad column is never read).
    c0 = scr_ref[:, pl.ds(7, Wo, stride=2), :]
    c1 = scr_ref[:, pl.ds(8, Wo, stride=2), :]
    c2 = scr_ref[:, pl.ds(9, Wo, stride=2), :]
    cm = jnp.maximum(jnp.maximum(c0, c1), c2)                   # (TH+2, Wo, Cp)

    # height: pooled row q = max(scr rows 2q, 2q+1, 2q+2) via a free reshape.
    cm = cm.reshape(THo + 1, 2, Wo, Cp)
    ev = cm[:, 0]                                               # rows 0,2,...,TH
    od = cm[:, 1]                                               # rows 1,3,...,TH+1
    out = jnp.maximum(jnp.maximum(ev[:THo], od[:THo]), ev[1:THo + 1])
    o_ref[0] = out.astype(o_ref.dtype)


def _vmem_footprint(TH, W, Wp, Cin, Cp):
    """Rough per-step VMEM estimate (double-buffered blocks + scratch + temps)."""
    THo, Wo = TH // 2, W // 2
    in_blk = TH * Wp * 3 * Cin * 2                    # bf16 input block
    w_blk = 3 * Cin * 3 * Cp * 2                      # bf16 weight
    p_blk = 4 * Cp * 4
    out_blk = THo * Wo * Cp * 4
    scr = (TH + 2) * (W + 8) * Cp * 4
    acc = TH * Wp * 3 * Cp * 4                        # matmul output slab
    y = TH * W * Cp * 4                               # LN intermediates
    return 2 * (in_blk + w_blk + p_blk + out_blk) + scr + acc + 4 * y


def _pick_row_tile(H, W, Wp, Cin, Cp, *, budget=18 * 2 ** 20, max_th=64):
    """Largest even divisor of H (<= max_th) whose footprint fits the budget."""
    best = 2
    for th in range(2, min(H, max_th) + 1, 2):
        if H % th == 0 and _vmem_footprint(th, W, Wp, Cin, Cp) <= budget:
            best = th
    return best


def conv_pool(x_nchw, w_oihw, bias, gamma, beta):
    """ConvPool forward. x_nchw: (B, Cin, H, W) -> (B, Cout, H//2, W//2)."""
    B, Cin, H, W = x_nchw.shape
    Cout = w_oihw.shape[0]
    assert H % 2 == 0 and W % 2 == 0, "BlockAggregation requires even spatial dims"
    Ho, Wo = H // 2, W // 2

    Cp = _round_up(Cout, 128)                     # lane-dense channel dim
    Wp = _round_up(W + 2, 8)                      # sublane-aligned padded width
    TH = _pick_row_tile(H, W, Wp, Cin, Cp)
    nT = H // TH
    THo = TH // 2

    # --- glue (layout / padding / parameter packing) in plain JAX ------------
    # bf16 MXU operands; bias / LayerNorm / pooling stay f32.
    x_nhwc = jnp.transpose(x_nchw, (0, 2, 3, 1)).astype(jnp.bfloat16)
    xp = jnp.pad(x_nhwc, ((0, 0), (1, 1), (1, Wp - W - 1), (0, 0)))   # (B,H+2,Wp,Cin)
    # kh-fold: row i holds rows i-1, i, i+1 of the padded image on channels.
    # TODO(synk): for very large Cin an unfolded 3-matmul form avoids the 3x
    #             bf16 input bytes; this op is compute-bound so keep the fold.
    xcat = jnp.concatenate([xp[:, 0:H], xp[:, 1:H + 1], xp[:, 2:H + 2]],
                           axis=-1)                                   # (B,H,Wp,3Cin)

    # weight: (Cout, Cin, kh, kw) -> (3*Cin, 3*Cp)  [K = kh*Cin+ci, N = kw*Cp+o]
    w_k = jnp.transpose(w_oihw, (2, 1, 3, 0))                         # (kh,ci,kw,o)
    w_k = w_k.reshape(3 * Cin, 3, Cout)
    w_k = jnp.pad(w_k, ((0, 0), (0, 0), (0, Cp - Cout)))
    wflat = w_k.reshape(3 * Cin, 3 * Cp).astype(jnp.bfloat16)

    # params packed into one operand: bias, gamma, beta, channel mask.
    pad_c = (0, Cp - Cout)
    prm = jnp.stack([
        jnp.pad(bias.astype(jnp.float32), pad_c),
        jnp.pad(gamma.astype(jnp.float32), pad_c),
        jnp.pad(beta.astype(jnp.float32), pad_c),
        (jnp.arange(Cp) < Cout).astype(jnp.float32),
    ], axis=0)                                                        # (4, Cp)

    kernel = functools.partial(_conv_pool_kernel, W=W, Cin3=3 * Cin,
                               Cout=Cout, Cp=Cp, TH=TH, Wp=Wp)

    fp = _vmem_footprint(TH, W, Wp, Cin, Cp)
    vmem_limit = int(min(64 * 2 ** 20, max(32 * 2 ** 20, int(1.5 * fp))))

    out_p = pl.pallas_call(
        kernel,
        out_shape=jax.ShapeDtypeStruct((B, Ho, Wo, Cp), jnp.float32),
        grid=(B, nT),
        in_specs=[
            # row-tiled input block: DMA pipelined across the t axis
            pl.BlockSpec((1, TH, Wp, 3 * Cin), lambda b, t: (b, t, 0, 0)),
            pl.BlockSpec((3 * Cin, 3 * Cp), lambda b, t: (0, 0)),
            pl.BlockSpec((4, Cp), lambda b, t: (0, 0)),
        ],
        out_specs=pl.BlockSpec((1, THo, Wo, Cp), lambda b, t: (b, t, 0, 0)),
        scratch_shapes=[pltpu.VMEM((TH + 2, W + 8, Cp), jnp.float32)],
        compiler_params=pltpu.CompilerParams(
            # batch is independent (megacore split on v7x); the row-tile axis
            # must stay sequential because of the carried LN row.
            dimension_semantics=("parallel", "arbitrary"),
            vmem_limit_bytes=vmem_limit,
        ),
    )(xcat, wflat, prm)

    # strip channel padding, back to NCHW (module contract)
    return jnp.transpose(out_p[..., :Cout], (0, 3, 1, 2))


def conv_pool_ref(x, w, b, gamma, beta):
    """Pure-JAX reference matching the PyTorch module (f32)."""
    y = jax.lax.conv_general_dilated(
        x, w, window_strides=(1, 1), padding=((1, 1), (1, 1)),
        dimension_numbers=("NCHW", "OIHW", "NCHW"),
        precision=jax.lax.Precision.HIGHEST)
    y = y + b[None, :, None, None]
    yt = jnp.transpose(y, (0, 2, 3, 1))
    mean = jnp.mean(yt, axis=-1, keepdims=True)
    var = jnp.mean(jnp.square(yt - mean), axis=-1, keepdims=True)
    yt = (yt - mean) * jax.lax.rsqrt(var + 1e-6) * gamma + beta
    y = jnp.transpose(yt, (0, 3, 1, 2))
    return jax.lax.reduce_window(
        y, -jnp.inf, jax.lax.max,
        window_dimensions=(1, 1, 3, 3), window_strides=(1, 1, 2, 2),
        padding=((0, 0), (0, 0), (1, 1), (1, 1)))


if __name__ == "__main__":
    B, Cin, Cout, H, W = 2, 4, 8, 16, 16

    key = jax.random.PRNGKey(0)
    kx, kw, kb, kg, kbt = jax.random.split(key, 5)
    x = jax.random.normal(kx, (B, Cin, H, W), jnp.float32)
    w = 0.1 * jax.random.normal(kw, (Cout, Cin, 3, 3), jnp.float32)
    b = 0.1 * jax.random.normal(kb, (Cout,), jnp.float32)
    gamma = 1.0 + 0.1 * jax.random.normal(kg, (Cout,), jnp.float32)
    beta = 0.1 * jax.random.normal(kbt, (Cout,), jnp.float32)

    out = jax.block_until_ready(conv_pool(x, w, b, gamma, beta))

    # The kernel feeds bf16 operands to the MXU (intended precision tradeoff),
    # so validate against the f32 reference evaluated on the same bf16-rounded
    # inputs; remaining differences are accumulation-order-level only.
    xq = x.astype(jnp.bfloat16).astype(jnp.float32)
    wq = w.astype(jnp.bfloat16).astype(jnp.float32)
    ref = jax.block_until_ready(conv_pool_ref(xq, wq, b, gamma, beta))

    assert out.shape == (B, Cout, H // 2, W // 2), out.shape
    max_err = float(jnp.max(jnp.abs(out - ref)))
    assert max_err < 2e-3, f"max abs error {max_err}"
    print("KERNEL_OK")
</pallas_src>

<mosaic_0001>
module attributes {stable_mosaic.version = 11 : i64} {
  func.func @_conv_pool_kernel(%arg0: i32, %arg1: i32, %arg2: memref<1x16x24x12xbf16, #tpu.memory_space<vmem>>, %arg3: memref<12x384xbf16, #tpu.memory_space<vmem>>, %arg4: memref<4x128xf32, #tpu.memory_space<vmem>>, %arg5: memref<1x8x8x128xf32, #tpu.memory_space<vmem>>, %arg6: memref<18x24x128xf32, #tpu.memory_space<vmem>>) attributes {dimension_semantics = [#tpu.dimension_semantics<parallel>, #tpu.dimension_semantics<arbitrary>], iteration_bounds = array<i64: 2, 1>, scalar_prefetch = 0 : i64, scratch_operands = 1 : i64, tpu.core_type = #tpu.core_type<tc>, window_params = [{transform_indices = @transform_0, window_bounds = array<i64: 1, 16, 24, 12>}, {pipeline_mode = #tpu.pipeline_mode<synchronous>, transform_indices = @transform_1, window_bounds = array<i64: 12, 384>}, {pipeline_mode = #tpu.pipeline_mode<synchronous>, transform_indices = @transform_2, window_bounds = array<i64: 4, 128>}, {transform_indices = @transform_3, window_bounds = array<i64: 1, 8, 8, 128>}]} {
    %c0_i32 = arith.constant 0 : i32
    %0 = arith.cmpi eq, %arg1, %c0_i32 : i32
    %1 = arith.extui %0 : i1 to i32
    %c0_i32_0 = arith.constant 0 : i32
    %2 = arith.cmpi ne, %1, %c0_i32_0 : i32
    scf.if %2 {
      %cst_31 = arith.constant 0xFF800000 : f32
      %72 = vector.broadcast %cst_31 : f32 to vector<1x24x128xf32>
      %c0_32 = arith.constant 0 : index
      %c0_33 = arith.constant 0 : index
      %c0_34 = arith.constant 0 : index
      %73 = vector.load %arg6[%c0_32, %c0_33, %c0_34] : memref<18x24x128xf32, #tpu.memory_space<vmem>>, vector<1x24x128xf32>
      tpu.vector_store %arg6[%c0_32, %c0_33, %c0_34], %72 {strides = array<i32>} : memref<18x24x128xf32, #tpu.memory_space<vmem>>, vector<1x24x128xf32>,
      %cst_35 = arith.constant 0xFF800000 : f32
      %74 = vector.broadcast %cst_35 : f32 to vector<1x24x128xf32>
      %c17 = arith.constant 17 : index
      %c0_36 = arith.constant 0 : index
      %c0_37 = arith.constant 0 : index
      %75 = vector.load %arg6[%c17, %c0_36, %c0_37] : memref<18x24x128xf32, #tpu.memory_space<vmem>>, vector<1x24x128xf32>
      tpu.vector_store %arg6[%c17, %c0_36, %c0_37], %74 {strides = array<i32>} : memref<18x24x128xf32, #tpu.memory_space<vmem>>, vector<1x24x128xf32>,
      %cst_38 = arith.constant 0xFF800000 : f32
      %76 = vector.broadcast %cst_38 : f32 to vector<18x1x128xf32>
      %c0_39 = arith.constant 0 : index
      %c7_40 = arith.constant 7 : index
      %c0_41 = arith.constant 0 : index
      %77 = vector.load %arg6[%c0_39, %c7_40, %c0_41] : memref<18x24x128xf32, #tpu.memory_space<vmem>>, vector<18x1x128xf32>
      tpu.vector_store %arg6[%c0_39, %c7_40, %c0_41], %76 {strides = array<i32>} : memref<18x24x128xf32, #tpu.memory_space<vmem>>, vector<18x1x128xf32>,
    } else {
    }
    %c0_i32_1 = arith.constant 0 : i32
    %3 = arith.cmpi sgt, %arg1, %c0_i32_1 : i32
    %4 = arith.extui %3 : i1 to i32
    %c0_i32_2 = arith.constant 0 : i32
    %5 = arith.cmpi ne, %4, %c0_i32_2 : i32
    scf.if %5 {
      %c16 = arith.constant 16 : index
      %c8_31 = arith.constant 8 : index
      %c0_32 = arith.constant 0 : index
      %72 = vector.load %arg6[%c16, %c8_31, %c0_32] : memref<18x24x128xf32, #tpu.memory_space<vmem>>, vector<1x16x128xf32>
      %c0_33 = arith.constant 0 : index
      %c8_34 = arith.constant 8 : index
      %c0_35 = arith.constant 0 : index
      %73 = vector.load %arg6[%c0_33, %c8_34, %c0_35] : memref<18x24x128xf32, #tpu.memory_space<vmem>>, vector<1x16x128xf32>
      tpu.vector_store %arg6[%c0_33, %c8_34, %c0_35], %72 {strides = array<i32>} : memref<18x24x128xf32, #tpu.memory_space<vmem>>, vector<1x16x128xf32>,
    } else {
    }
    %c0 = arith.constant 0 : index
    %c0_3 = arith.constant 0 : index
    %c0_4 = arith.constant 0 : index
    %c0_5 = arith.constant 0 : index
    %6 = vector.load %arg2[%c0, %c0_3, %c0_4, %c0_5] : memref<1x16x24x12xbf16, #tpu.memory_space<vmem>>, vector<1x16x24x12xbf16>
    %7 = vector.shape_cast %6 : vector<1x16x24x12xbf16> to vector<16x24x12xbf16>
    %8 = vector.shape_cast %7 : vector<16x24x12xbf16> to vector<384x12xbf16>
    %c0_6 = arith.constant 0 : index
    %c0_7 = arith.constant 0 : index
    %9 = vector.load %arg3[%c0_6, %c0_7] : memref<12x384xbf16, #tpu.memory_space<vmem>>, vector<12x384xbf16>
    %cst = arith.constant dense<0.000000e+00> : vector<384x384xf32>
    %10 = tpu.matmul %8, %9, %cst {dimension_numbers = #tpu.dot_dimension_numbers<[1], [0], [0], [1], [0, 0, 1, 1], [], []>} : vector<384x12xbf16>, vector<12x384xbf16>, vector<384x384xf32> -> vector<384x384xf32>
    %11 = vector.shape_cast %10 : vector<384x384xf32> to vector<16x24x384xf32>
    %12 = vector.extract_strided_slice %11 {offsets = [0, 0, 0], sizes = [16, 16, 128], strides = [1, 1, 1]} : vector<16x24x384xf32> to vector<16x16x128xf32>
    %13 = vector.extract_strided_slice %11 {offsets = [0, 1, 128], sizes = [16, 16, 128], strides = [1, 1, 1]} : vector<16x24x384xf32> to vector<16x16x128xf32>
    %14 = arith.addf %12, %13 : vector<16x16x128xf32>
    %15 = vector.extract_strided_slice %11 {offsets = [0, 2, 256], sizes = [16, 16, 128], strides = [1, 1, 1]} : vector<16x24x384xf32> to vector<16x16x128xf32>
    %16 = arith.addf %14, %15 : vector<16x16x128xf32>
    %c0_8 = arith.constant 0 : index
    %c0_9 = arith.constant 0 : index
    %17 = vector.load %arg4[%c0_8, %c0_9] : memref<4x128xf32, #tpu.memory_space<vmem>>, vector<1x128xf32>
    %18 = vector.shape_cast %17 : vector<1x128xf32> to vector<128xf32>
    %19 = vector.shape_cast %18 : vector<128xf32> to vector<1x1x128xf32>
    %20 = vector.broadcast %19 : vector<1x1x128xf32> to vector<16x16x128xf32>
    %21 = arith.addf %16, %20 : vector<16x16x128xf32>
    %cst_10 = arith.constant dense<0.000000e+00> : vector<16x16xf32>
    %22 = vector.multi_reduction <add>, %21, %cst_10 [2] : vector<16x16x128xf32> to vector<16x16xf32>
    %23 = vector.shape_cast %22 : vector<16x16xf32> to vector<16x16x1xf32>
    %cst_11 = arith.constant 1.250000e-01 : f32
    %24 = vector.broadcast %cst_11 : f32 to vector<16x16x1xf32>
    %25 = arith.mulf %23, %24 : vector<16x16x1xf32>
    %26 = vector.broadcast %25 : vector<16x16x1xf32> to vector<16x16x128xf32>
    %27 = arith.subf %21, %26 : vector<16x16x128xf32>
    %c3 = arith.constant 3 : index
    %c0_12 = arith.constant 0 : index
    %28 = vector.load %arg4[%c3, %c0_12] : memref<4x128xf32, #tpu.memory_space<vmem>>, vector<1x128xf32>
    %29 = vector.shape_cast %28 : vector<1x128xf32> to vector<128xf32>
    %30 = vector.shape_cast %29 : vector<128xf32> to vector<1x1x128xf32>
    %31 = vector.broadcast %30 : vector<1x1x128xf32> to vector<16x16x128xf32>
    %32 = arith.mulf %27, %31 : vector<16x16x128xf32>
    %33 = arith.mulf %32, %32 : vector<16x16x128xf32>
    %cst_13 = arith.constant dense<0.000000e+00> : vector<16x16xf32>
    %34 = vector.multi_reduction <add>, %33, %cst_13 [2] : vector<16x16x128xf32> to vector<16x16xf32>
    %35 = vector.shape_cast %34 : vector<16x16xf32> to vector<16x16x1xf32>
    %cst_14 = arith.constant 1.250000e-01 : f32
    %36 = vector.broadcast %cst_14 : f32 to vector<16x16x1xf32>
    %37 = arith.mulf %35, %36 : vector<16x16x1xf32>
    %cst_15 = arith.constant 9.99999997E-7 : f32
    %38 = vector.broadcast %cst_15 : f32 to vector<16x16x1xf32>
    %39 = arith.addf %37, %38 : vector<16x16x1xf32>
    %40 = math.rsqrt %39 : vector<16x16x1xf32>
    %41 = vector.broadcast %40 : vector<16x16x1xf32> to vector<16x16x128xf32>
    %42 = arith.mulf %32, %41 : vector<16x16x128xf32>
    %c1 = arith.constant 1 : index
    %c0_16 = arith.constant 0 : index
    %43 = vector.load %arg4[%c1, %c0_16] : memref<4x128xf32, #tpu.memory_space<vmem>>, vector<1x128xf32>
    %44 = vector.shape_cast %43 : vector<1x128xf32> to vector<128xf32>
    %45 = vector.shape_cast %44 : vector<128xf32> to vector<1x1x128xf32>
    %46 = vector.broadcast %45 : vector<1x1x128xf32> to vector<16x16x128xf32>
    %47 = arith.mulf %42, %46 : vector<16x16x128xf32>
    %c2 = arith.constant 2 : index
    %c0_17 = arith.constant 0 : index
    %48 = vector.load %arg4[%c2, %c0_17] : memref<4x128xf32, #tpu.memory_space<vmem>>, vector<1x128xf32>
    %49 = vector.shape_cast %48 : vector<1x128xf32> to vector<128xf32>
    %50 = vector.shape_cast %49 : vector<128xf32> to vector<1x1x128xf32>
    %51 = vector.broadcast %50 : vector<1x1x128xf32> to vector<16x16x128xf32>
    %52 = arith.addf %47, %51 : vector<16x16x128xf32>
    %c1_18 = arith.constant 1 : index
    %c8 = arith.constant 8 : index
    %c0_19 = arith.constant 0 : index
    %53 = vector.load %arg6[%c1_18, %c8, %c0_19] : memref<18x24x128xf32, #tpu.memory_space<vmem>>, vector<16x16x128xf32>
    tpu.vector_store %arg6[%c1_18, %c8, %c0_19], %52 {strides = array<i32>} : memref<18x24x128xf32, #tpu.memory_space<vmem>>, vector<16x16x128xf32>,
    %c0_20 = arith.constant 0 : index
    %c7 = arith.constant 7 : index
    %c0_21 = arith.constant 0 : index
    %54 = tpu.strided_load %arg6[%c0_20, %c7, %c0_21] {strides = array<i32: 1, 2, 1>} : memref<18x24x128xf32, #tpu.memory_space<vmem>>, vector<18x8x128xf32>
    %c0_22 = arith.constant 0 : index
    %c8_23 = arith.constant 8 : index
    %c0_24 = arith.constant 0 : index
    %55 = tpu.strided_load %arg6[%c0_22, %c8_23, %c0_24] {strides = array<i32: 1, 2, 1>} : memref<18x24x128xf32, #tpu.memory_space<vmem>>, vector<18x8x128xf32>
    %c0_25 = arith.constant 0 : index
    %c9 = arith.constant 9 : index
    %c0_26 = arith.constant 0 : index
    %56 = tpu.strided_load %arg6[%c0_25, %c9, %c0_26] {strides = array<i32: 1, 2, 1>} : memref<18x24x128xf32, #tpu.memory_space<vmem>>, vector<18x8x128xf32>
    %57 = arith.maximumf %54, %55 : vector<18x8x128xf32>
    %58 = arith.maximumf %57, %56 : vector<18x8x128xf32>
    %59 = vector.shape_cast %58 : vector<18x8x128xf32> to vector<9x2x8x128xf32>
    %60 = vector.extract_strided_slice %59 {offsets = [0, 0, 0, 0], sizes = [9, 1, 8, 128], strides = [1, 1, 1, 1]} : vector<9x2x8x128xf32> to vector<9x1x8x128xf32>
    %61 = vector.shape_cast %60 : vector<9x1x8x128xf32> to vector<9x8x128xf32>
    %62 = vector.extract_strided_slice %59 {offsets = [0, 1, 0, 0], sizes = [9, 1, 8, 128], strides = [1, 1, 1, 1]} : vector<9x2x8x128xf32> to vector<9x1x8x128xf32>
    %63 = vector.shape_cast %62 : vector<9x1x8x128xf32> to vector<9x8x128xf32>
    %64 = vector.extract_strided_slice %61 {offsets = [0, 0, 0], sizes = [8, 8, 128], strides = [1, 1, 1]} : vector<9x8x128xf32> to vector<8x8x128xf32>
    %65 = vector.extract_strided_slice %63 {offsets = [0, 0, 0], sizes = [8, 8, 128], strides = [1, 1, 1]} : vector<9x8x128xf32> to vector<8x8x128xf32>
    %66 = arith.maximumf %64, %65 : vector<8x8x128xf32>
    %67 = vector.extract_strided_slice %61 {offsets = [1, 0, 0], sizes = [8, 8, 128], strides = [1, 1, 1]} : vector<9x8x128xf32> to vector<8x8x128xf32>
    %68 = arith.maximumf %66, %67 : vector<8x8x128xf32>
    %c0_27 = arith.constant 0 : index
    %c0_28 = arith.constant 0 : index
    %c0_29 = arith.constant 0 : index
    %c0_30 = arith.constant 0 : index
    %69 = vector.load %arg5[%c0_27, %c0_28, %c0_29, %c0_30] : memref<1x8x8x128xf32, #tpu.memory_space<vmem>>, vector<1x8x8x128xf32>
    %70 = vector.shape_cast %69 : vector<1x8x8x128xf32> to vector<8x8x128xf32>
    %71 = vector.shape_cast %68 : vector<8x8x128xf32> to vector<1x8x8x128xf32>
    tpu.vector_store %arg5[%c0_27, %c0_28, %c0_29, %c0_30], %71 {strides = array<i32>} : memref<1x8x8x128xf32, #tpu.memory_space<vmem>>, vector<1x8x8x128xf32>,
    return
  }
  func.func @transform_0(%arg0: i32, %arg1: i32) -> (i32, i32, i32, i32) {
    %c0_i32 = arith.constant 0 : i32
    %c0_i32_0 = arith.constant 0 : i32
    %c0_i32_1 = arith.constant 0 : i32
    return %arg0, %arg1, %c0_i32, %c0_i32_0 : i32, i32, i32, i32
  }
  func.func @transform_1(%arg0: i32, %arg1: i32) -> (i32, i32) {
    %c0_i32 = arith.constant 0 : i32
    %c0_i32_0 = arith.constant 0 : i32
    %c0_i32_1 = arith.constant 0 : i32
    return %c0_i32, %c0_i32_0 : i32, i32
  }
  func.func @transform_2(%arg0: i32, %arg1: i32) -> (i32, i32) {
    %c0_i32 = arith.constant 0 : i32
    %c0_i32_0 = arith.constant 0 : i32
    %c0_i32_1 = arith.constant 0 : i32
    return %c0_i32, %c0_i32_0 : i32, i32
  }
  func.func @transform_3(%arg0: i32, %arg1: i32) -> (i32, i32, i32, i32) {
    %c0_i32 = arith.constant 0 : i32
    %c0_i32_0 = arith.constant 0 : i32
    %c0_i32_1 = arith.constant 0 : i32
    return %arg0, %arg1, %c0_i32, %c0_i32_0 : i32, i32, i32, i32
  }
}

</mosaic_0001>

<llo_original>
// kernel: tpu_custom_call.1
$region0: #{tpu_custom_call.1}
  #allocation0 [shape = 'u32[]', space=smem, size = 0x4, offset = 0x4, fixed_abs, tag = 'smem constant byte address 0x4 - core index']
  #allocation1 [shape = 'u32[144,128]{1,0:T(1,128)}', space=vmem, size = 0x12000, scoped, tag = 'internal scratch']
  #allocation2 [shape = 'f32[18,24,128]{2,1,0:T(8,128)}', space=vmem, size = 0x36000, scoped, tag = 'scratch operand']
  %s0 = inlined_call_operand.vmem [shape: bf16[2,16,24,12], index: 0, kind: input, shape index: {}]
  %s1 = inlined_call_operand.vmem [shape: bf16[12,384], index: 1, kind: input, shape index: {}]
  %s2 = inlined_call_operand.vmem [shape: f32[4,128], index: 2, kind: input, shape index: {}]
  %s3 = inlined_call_operand.hbm [shape: f32[2,8,8,128], index: 3, kind: output, shape index: {}]
  %s4 = sld [smem:[#allocation0]]
  $region53: #{tpu_custom_call.1} parent=0
    _
  %s6 = ssub.s32 1, %s4
  %s7 = scalar_select 0, %s6, %s4
  $region1: #{tpu_custom_call.1} parent=0
    #allocation3 [shape = 'u8[65536]{0}', space=vmem, size = 0x10000, scoped, tag = 'output window, operand 0']
    #allocation4 [shape = 's32[2]{0}', space=sflag, size = 0x8, scoped, tag = 'scoped memory for tpu_custom_call.1']
    %8 = vsyncpa [#allocation4], 0
    %s9 = scalar_lea.sflag [#allocation4], 1
    %10 = vsyncpa %s9, 0
    loop: start=0, step=1, limit=4
    $region2: #{tpu_custom_call.1} parent=1 // loop_pre_header
      _
    $region3: #{tpu_custom_call.1} parent=1 // loop_header
      %s12 = sphi 0, %s16
      %p13 = scmp.ge.s32.totalorder %s12, 4
      %s19 = sphi 0, %s31
      %s20 = sphi 0, %s27
      %s21 = sphi 0, %s19
      %s22 = sphi 0, %s20
      %s23 = sphi 0, %s21
      %s24 = sphi 0, %s22
      %s36 = sphi 0, %s38
      %s39 = sphi 0, %s36
      %s40 = sphi 0, %s39
      %s56 = sphi 0, %s40
      %s60 = sphi 0, %s60
      %s62 = sphi 0, %s60
      %s63 = sphi 0, %s62
      %s77 = sphi 0, %s63
      %s81 = sphi 0, %s81
      %s83 = sphi 0, %s81
      %s84 = sphi 0, %s83
      %s98 = sphi 0, %s84
      %s106 = sphi 0, %s108
      %s109 = sphi 0, %s106
      %s110 = sphi 0, %s109
      %s126 = sphi 0, %s110
    $region4: #{tpu_custom_call.1} parent=1 // loop_header_branch
      %15 = sbr.rel (%p13) target = $region8
    $region5: #{tpu_custom_call.1} parent=1 // loop_body
      %s17 = ssub.s32 %s12, 1
      %s18 = ssub.s32 %s12, 2
      %s25 = sadd.s32 1, %s20
      %p26 = scmp.ge.s32.totalorder %s25, 1
      %s27 = scalar_select %p26, 0, %s25
      %s28 = sadd.s32 1, %s19
      %s29 = scalar_select %p26, %s28, %s19
      %p30 = scmp.ge.s32.totalorder %s29, 2
      %s31 = scalar_select %p30, 0, %s29
      %s32 = ssub.s32 %s19, %s31
      %s33 = ssub.s32 %s20, %s27
      %s34 = sor.u32 %s32, %s33
      %p35 = scmp.eq.s32.totalorder %s34, 0
      %s37 = sadd.s32 %s36, 1
      %s38 = scalar_select %p35, %s36, %s37
      %p41 = pneg %p35
      %p42 = scmp.eq.s32.totalorder %s12, 1
      %p43 = por %p41, %p42
      %p44 = scmp.ne.s32.totalorder %s36, %s39
      %p45 = scmp.eq.s32.totalorder %s12, 0
      %p46 = por %p44, %p45
      %p47 = scmp.ne.s32.totalorder %s36, %s39
      %p48 = scmp.eq.s32.totalorder %s17, 1
      %p49 = por %p47, %p48
      %p50 = scmp.ne.s32.totalorder %s39, %s40
      %p51 = scmp.eq.s32.totalorder %s17, 0
      %p52 = por %p50, %p51
      %p53 = scmp.ne.s32.totalorder %s39, %s40
      %p54 = scmp.eq.s32.totalorder %s18, 1
      %p55 = por %p53, %p54
      %p57 = scmp.ne.s32.totalorder %s40, %s56
      %p58 = scmp.eq.s32.totalorder %s18, 0
      %p59 = por %p57, %p58
      %s61 = sadd.s32 %s60, 1
      %p64 = scmp.eq.s32.totalorder %s12, 1
      %p65 = scmp.ne.s32.totalorder %s60, %s62
      %p66 = scmp.eq.s32.totalorder %s12, 0
      %p67 = por %p65, %p66
      %p68 = scmp.ne.s32.totalorder %s60, %s62
      %p69 = scmp.eq.s32.totalorder %s17, 1
      %p70 = por %p68, %p69
      %p71 = scmp.ne.s32.totalorder %s62, %s63
      %p72 = scmp.eq.s32.totalorder %s17, 0
      %p73 = por %p71, %p72
      %p74 = scmp.ne.s32.totalorder %s62, %s63
      %p75 = scmp.eq.s32.totalorder %s18, 1
      %p76 = por %p74, %p75
      %p78 = scmp.ne.s32.totalorder %s63, %s77
      %p79 = scmp.eq.s32.totalorder %s18, 0
      %p80 = por %p78, %p79
      %s82 = sadd.s32 %s81, 1
      %p85 = scmp.eq.s32.totalorder %s12, 1
      %p86 = scmp.ne.s32.totalorder %s81, %s83
      %p87 = scmp.eq.s32.totalorder %s12, 0
      %p88 = por %p86, %p87
      %p89 = scmp.ne.s32.totalorder %s81, %s83
      %p90 = scmp.eq.s32.totalorder %s17, 1
      %p91 = por %p89, %p90
      %p92 = scmp.ne.s32.totalorder %s83, %s84
      %p93 = scmp.eq.s32.totalorder %s17, 0
      %p94 = por %p92, %p93
      %p95 = scmp.ne.s32.totalorder %s83, %s84
      %p96 = scmp.eq.s32.totalorder %s18, 1
      %p97 = por %p95, %p96
      %p99 = scmp.ne.s32.totalorder %s84, %s98
      %p100 = scmp.eq.s32.totalorder %s18, 0
      %p101 = por %p99, %p100
      %s102 = ssub.s32 %s19, %s31
      %s103 = ssub.s32 %s20, %s27
      %s104 = sor.u32 %s102, %s103
      %p105 = scmp.eq.s32.totalorder %s104, 0
      %s107 = sadd.s32 %s106, 1
      %s108 = scalar_select %p105, %s106, %s107
      %p111 = pneg %p105
      %p112 = scmp.eq.s32.totalorder %s12, 1
      %p113 = por %p111, %p112
      %p114 = scmp.ne.s32.totalorder %s106, %s109
      %p115 = scmp.eq.s32.totalorder %s12, 0
      %p116 = por %p114, %p115
      %p117 = scmp.ne.s32.totalorder %s106, %s109
      %p118 = scmp.eq.s32.totalorder %s17, 1
      %p119 = por %p117, %p118
      %p120 = scmp.ne.s32.totalorder %s109, %s110
      %p121 = scmp.eq.s32.totalorder %s17, 0
      %p122 = por %p120, %p121
      %p123 = scmp.ne.s32.totalorder %s109, %s110
      %p124 = scmp.eq.s32.totalorder %s18, 1
      %p125 = por %p123, %p124
      %p127 = scmp.ne.s32.totalorder %s110, %s126
      %p128 = scmp.eq.s32.totalorder %s18, 0
      %p129 = por %p127, %p128
      %p130 = scmp.le.s32.totalorder 1, %s12
      %p131 = scmp.lt.s32.totalorder %s12, 3
      %p132 = pnand %p130, %p131
      %p133 = pneg %p132
      // Predicated region
      $region9: #{tpu_custom_call.1} parent=5 // pred_check
        _
      $region10: #{tpu_custom_call.1} parent=5 // pred_check_branch
        %135 = sbr.rel (%p132) target = $region12
      $region11: #{tpu_custom_call.1} parent=5 // pred_region
        %s136 = ssub.s32 %s12, 1
        // Predicated region
        $region13: #{tpu_custom_call.1} parent=11 // pred_check
          %p137 = pneg %p73
        $region14: #{tpu_custom_call.1} parent=11 // pred_check_branch
          %139 = sbr.rel (%p137) target = $region16
        $region15: #{tpu_custom_call.1} parent=11 // pred_region
          _
        $region16: #{tpu_custom_call.1} parent=11 // pred_fallthru
          _
        // Predicated region
        $region17: #{tpu_custom_call.1} parent=11 // pred_check
          %p140 = pneg %p94
        $region18: #{tpu_custom_call.1} parent=11 // pred_check_branch
          %142 = sbr.rel (%p140) target = $region20
        $region19: #{tpu_custom_call.1} parent=11 // pred_region
          _
        $region20: #{tpu_custom_call.1} parent=11 // pred_fallthru
          _
      $region12: #{tpu_custom_call.1} parent=5 // pred_fallthru
        _
      %p143 = scmp.lt.s32.totalorder %s12, 2
      // Predicated region
      $region21: #{tpu_custom_call.1} parent=5 // pred_check
        %p144 = pneg %p143
      $region22: #{tpu_custom_call.1} parent=5 // pred_check_branch
        %146 = sbr.rel (%p144) target = $region24
      $region23: #{tpu_custom_call.1} parent=5 // pred_region
        // Predicated region
        $region25: #{tpu_custom_call.1} parent=23 // pred_check
          %p147 = pneg %p46
        $region26: #{tpu_custom_call.1} parent=23 // pred_check_branch
          %149 = sbr.rel (%p147) target = $region28
        $region27: #{tpu_custom_call.1} parent=23 // pred_region
          %s150 = smul.u32 16, %s20
          %p151 = scmp.lt.s32.totalorder %s19, 1
          %s152 = scalar_select %p151, %s19, 1
          %p153 = scmp.lt.s32.totalorder %s150, 15
          %s154 = scalar_select %p153, %s150, 15
          %s155 = smul.addr %s154, 3
          %s156 = smul.addr %s152, 48
          %s157 = sadd.s32 %s155, %s156
          %s158 = smul.addr %s157, 4
          %s159 = scalar_lea.vmem %s0, %s158
          %s160 = smul.u32 16, %s20
        $region28: #{tpu_custom_call.1} parent=23 // pred_fallthru
          _
      $region24: #{tpu_custom_call.1} parent=5 // pred_fallthru
        _
      %p161 = scmp.le.s32.totalorder 1, %s12
      %p162 = scmp.lt.s32.totalorder %s12, 3
      %p163 = pnand %p161, %p162
      %p164 = pneg %p163
      // Predicated region
      $region29: #{tpu_custom_call.1} parent=5 // pred_check
        _
      $region30: #{tpu_custom_call.1} parent=5 // pred_check_branch
        %166 = sbr.rel (%p163) target = $region32
      $region31: #{tpu_custom_call.1} parent=5 // pred_region
        %s167 = ssub.s32 %s12, 1
        %s168 = smul.u32 16, %s22
        %p169 = scmp.lt.s32.totalorder %s21, 1
        %s170 = scalar_select %p169, %s21, 1
        %p171 = scmp.lt.s32.totalorder %s168, 15
        %s172 = scalar_select %p171, %s168, 15
        %s173 = smul.addr %s172, 3
        %s174 = smul.addr %s170, 48
        %s175 = sadd.s32 %s173, %s174
        %s176 = smul.addr %s175, 4
        %s177 = scalar_lea.vmem %s0, %s176
        %p178 = pneg %p52
        %p179 = pneg %p49
        %p180 = pneg %p73
        %p181 = pneg %p70
        %p182 = pneg %p94
        %p183 = pneg %p91
        %p184 = pneg %p122
        %p185 = pneg %p119
        %s186 = sand.u32 %s109, 1
        %s187 = scalar_lea.sflag [#allocation4], %s186
        %s188 = sand.u32 %s109, 1
        %s189 = smul.addr %s188, 64
        %s190 = scalar_lea.vmem [#allocation3], %s189
        %s191 = smul.u32 16, %s22
        %p192 = scmp.lt.s32.totalorder %s21, 1
        %s193 = scalar_select %p192, %s21, 1
        %p194 = scmp.lt.s32.totalorder %s191, 15
        %s195 = scalar_select %p194, %s191, 15
        %s196 = smul.addr %s195, 3
        %s197 = smul.addr %s193, 48
        %s198 = sadd.s32 %s196, %s197
        %s199 = smul.addr %s198, 4
        %s200 = scalar_lea.vmem %s0, %s199
        %s201 = smul.u32 16, %s22
        %s202 = smul.u32 8, %s22
        %p204 = scmp.eq.s32.totalorder %s22, 0
        // Predicated region
        $region33: #{tpu_custom_call.1} parent=31 // pred_check
          %p205 = pneg %p204
        $region34: #{tpu_custom_call.1} parent=31 // pred_check_branch
          %207 = sbr.rel (%p205) target = $region36
        $region35: #{tpu_custom_call.1} parent=31 // pred_region
          %208 = vst [vmem:[#allocation2] sm:$0xff] -inf
          %209 = vst [vmem:[#allocation2 + $0x8] sm:$0xff] -inf
          %210 = vst [vmem:[#allocation2 + $0x10] sm:$0xff] -inf
          %s211 = scalar_lea.vmem [#allocation2], 408
          %212 = vst [vmem:[%s211] sm:$0xff] -inf
          %213 = vst [vmem:[%s211 + $0x8] sm:$0xff] -inf
          %214 = vst [vmem:[%s211 + $0x10] sm:$0xff] -inf
          %215 = vst [vmem:[#allocation2 + $0x7] sm:$0x1] -inf
          %216 = vst [vmem:[#allocation2 + $0x1f] sm:$0x1] -inf
          %217 = vst [vmem:[#allocation2 + $0x37] sm:$0x1] -inf
          %218 = vst [vmem:[#allocation2 + $0x4f] sm:$0x1] -inf
          %219 = vst [vmem:[#allocation2 + $0x67] sm:$0x1] -inf
          %220 = vst [vmem:[#allocation2 + $0x7f] sm:$0x1] -inf
          %221 = vst [vmem:[#allocation2 + $0x97] sm:$0x1] -inf
          %222 = vst [vmem:[#allocation2 + $0xaf] sm:$0x1] -inf
          %223 = vst [vmem:[#allocation2 + $0xc7] sm:$0x1] -inf
          %224 = vst [vmem:[#allocation2 + $0xdf] sm:$0x1] -inf
          %225 = vst [vmem:[#allocation2 + $0xf7] sm:$0x1] -inf
          %226 = vst [vmem:[#allocation2 + $0x10f] sm:$0x1] -inf
          %227 = vst [vmem:[#allocation2 + $0x127] sm:$0x1] -inf
          %228 = vst [vmem:[#allocation2 + $0x13f] sm:$0x1] -inf
          %229 = vst [vmem:[#allocation2 + $0x157] sm:$0x1] -inf
          %230 = vst [vmem:[#allocation2 + $0x16f] sm:$0x1] -inf
          %231 = vst [vmem:[#allocation2 + $0x187] sm:$0x1] -inf
          %232 = vst [vmem:[#allocation2 + $0x19f] sm:$0x1] -inf
        $region36: #{tpu_custom_call.1} parent=31 // pred_fallthru
          _
        %p233 = scmp.gt.s32.totalorder %s22, 0
        // Predicated region
        $region37: #{tpu_custom_call.1} parent=31 // pred_check
          %p234 = pneg %p233
        $region38: #{tpu_custom_call.1} parent=31 // pred_check_branch
          %236 = sbr.rel (%p234) target = $region40
        $region39: #{tpu_custom_call.1} parent=31 // pred_region
          %s237 = scalar_lea.vmem [#allocation2], 384
          %v238 = vld [vmem:[%s237 + $0x8] sm:$0xff]
          %v239 = vld [vmem:[%s237 + $0x10] sm:$0xff]
          %240 = vst [vmem:[#allocation2 + $0x8] sm:$0xff] %v238
          %241 = vst [vmem:[#allocation2 + $0x10] sm:$0xff] %v239
        $region40: #{tpu_custom_call.1} parent=31 // pred_fallthru
          _
        %v242 = vld [vmem:[%s200] sm:$0xf]
        %v243 = vld [vmem:[%s200 + $0x4] sm:$0xf]
        %v244 = vld [vmem:[%s200 + $0x8] sm:$0xf]
        %v245 = vld [vmem:[%s200 + $0xc] sm:$0xf]
        %v246 = vld [vmem:[%s200 + $0x10] sm:$0xf]
        %v247 = vld [vmem:[%s200 + $0x14] sm:$0xf]
        %v248 = vld [vmem:[%s200 + $0x18] sm:$0xf]
        %v249 = vld [vmem:[%s200 + $0x1c] sm:$0xf]
        %v250 = vld [vmem:[%s200 + $0x20] sm:$0xf]
        %v251 = vld [vmem:[%s200 + $0x24] sm:$0xf]
        %v252 = vld [vmem:[%s200 + $0x28] sm:$0xf]
        %v253 = vld [vmem:[%s200 + $0x2c] sm:$0xf]
        %v254 = vld [vmem:[%s200 + $0x30] sm:$0xf]
        %v255 = vld [vmem:[%s200 + $0x34] sm:$0xf]
        %v256 = vld [vmem:[%s200 + $0x38] sm:$0xf]
        %v257 = vld [vmem:[%s200 + $0x3c] sm:$0xf]
        %v258 = vld [vmem:[%s200 + $0x40] sm:$0xf]
        %v259 = vld [vmem:[%s200 + $0x44] sm:$0xf]
        %v260 = vld [vmem:[%s200 + $0x48] sm:$0xf]
        %v261 = vld [vmem:[%s200 + $0x4c] sm:$0xf]
        %v262 = vld [vmem:[%s200 + $0x50] sm:$0xf]
        %v263 = vld [vmem:[%s200 + $0x54] sm:$0xf]
        %v264 = vld [vmem:[%s200 + $0x58] sm:$0xf]
        %v265 = vld [vmem:[%s200 + $0x5c] sm:$0xf]
        %v266 = vld [vmem:[%s200 + $0x60] sm:$0xf]
        %v267 = vld [vmem:[%s200 + $0x64] sm:$0xf]
        %v268 = vld [vmem:[%s200 + $0x68] sm:$0xf]
        %v269 = vld [vmem:[%s200 + $0x6c] sm:$0xf]
        %v270 = vld [vmem:[%s200 + $0x70] sm:$0xf]
        %v271 = vld [vmem:[%s200 + $0x74] sm:$0xf]
        %v272 = vld [vmem:[%s200 + $0x78] sm:$0xf]
        %v273 = vld [vmem:[%s200 + $0x7c] sm:$0xf]
        %v274 = vld [vmem:[%s200 + $0x80] sm:$0xf]
        %v275 = vld [vmem:[%s200 + $0x84] sm:$0xf]
        %v276 = vld [vmem:[%s200 + $0x88] sm:$0xf]
        %v277 = vld [vmem:[%s200 + $0x8c] sm:$0xf]
        %v278 = vld [vmem:[%s200 + $0x90] sm:$0xf]
        %v279 = vld [vmem:[%s200 + $0x94] sm:$0xf]
        %v280 = vld [vmem:[%s200 + $0x98] sm:$0xf]
        %v281 = vld [vmem:[%s200 + $0x9c] sm:$0xf]
        %v282 = vld [vmem:[%s200 + $0xa0] sm:$0xf]
        %v283 = vld [vmem:[%s200 + $0xa4] sm:$0xf]
        %v284 = vld [vmem:[%s200 + $0xa8] sm:$0xf]
        %v285 = vld [vmem:[%s200 + $0xac] sm:$0xf]
        %v286 = vld [vmem:[%s200 + $0xb0] sm:$0xf]
        %v287 = vld [vmem:[%s200 + $0xb4] sm:$0xf]
        %v288 = vld [vmem:[%s200 + $0xb8] sm:$0xf]
        %v289 = vld [vmem:[%s200 + $0xbc] sm:$0xf]
        %v290 = vld [vmem:[%s1] sm:$0xff]
        %v291 = vld [vmem:[%s1 + $0x8] sm:$0xf]
        %v292 = vld [vmem:[%s1 + $0xc] sm:$0x33]
        %v293 = vld [vmem:[%s1 + $0x14] sm:$0x3]
        %v342 = vunpack.c.l.b16 %v242
        %v343 = vunpack.c.l.b16 %v243
        %v344 = vunpack.c.l.b16 %v244
        %v345 = vunpack.c.l.b16 %v245
        %v346 = vunpack.c.l.b16 %v246
        %v347 = vunpack.c.l.b16 %v247
        %v348 = vunpack.c.l.b16 %v248
        %v349 = vunpack.c.l.b16 %v249
        %v350 = vunpack.c.l.b16 %v250
        %v351 = vunpack.c.l.b16 %v251
        %v352 = vunpack.c.l.b16 %v252
        %v353 = vunpack.c.l.b16 %v253
        %v354 = vunpack.c.l.b16 %v254
        %v355 = vunpack.c.l.b16 %v255
        %v356 = vunpack.c.l.b16 %v256
        %v357 = vunpack.c.l.b16 %v257
        %v358 = vunpack.c.l.b16 %v258
        %v359 = vunpack.c.l.b16 %v259
        %v360 = vunpack.c.l.b16 %v260
        %v361 = vunpack.c.l.b16 %v261
        %v362 = vunpack.c.l.b16 %v262
        %v363 = vunpack.c.l.b16 %v263
        %v364 = vunpack.c.l.b16 %v264
        %v365 = vunpack.c.l.b16 %v265
        %v366 = vunpack.c.l.b16 %v266
        %v367 = vunpack.c.l.b16 %v267
        %v368 = vunpack.c.l.b16 %v268
        %v369 = vunpack.c.l.b16 %v269
        %v370 = vunpack.c.l.b16 %v270
        %v371 = vunpack.c.l.b16 %v271
        %v372 = vunpack.c.l.b16 %v272
        %v373 = vunpack.c.l.b16 %v273
        %v374 = vunpack.c.l.b16 %v274
        %v375 = vunpack.c.l.b16 %v275
        %v376 = vunpack.c.l.b16 %v276
        %v377 = vunpack.c.l.b16 %v277
        %v378 = vunpack.c.l.b16 %v278
        %v379 = vunpack.c.l.b16 %v279
        %v380 = vunpack.c.l.b16 %v280
        %v381 = vunpack.c.l.b16 %v281
        %v382 = vunpack.c.l.b16 %v282
        %v383 = vunpack.c.l.b16 %v283
        %v384 = vunpack.c.l.b16 %v284
        %v385 = vunpack.c.l.b16 %v285
        %v386 = vunpack.c.l.b16 %v286
        %v387 = vunpack.c.l.b16 %v287
        %v388 = vunpack.c.l.b16 %v288
        %v389 = vunpack.c.l.b16 %v289
        %v390 = vpack.c.b16 %v343, %v342
        %v391 = vpack.c.b16 %v345, %v344
        %v392 = vpack.c.b16 %v347, %v346
        %v393 = vpack.c.b16 %v349, %v348
        %v394 = vpack.c.b16 %v351, %v350
        %v395 = vpack.c.b16 %v353, %v352
        %v396 = vpack.c.b16 %v355, %v354
        %v397 = vpack.c.b16 %v357, %v356
        %v398 = vpack.c.b16 %v359, %v358
        %v399 = vpack.c.b16 %v361, %v360
        %v400 = vpack.c.b16 %v363, %v362
        %v401 = vpack.c.b16 %v365, %v364
        %v402 = vpack.c.b16 %v367, %v366
        %v403 = vpack.c.b16 %v369, %v368
        %v404 = vpack.c.b16 %v371, %v370
        %v405 = vpack.c.b16 %v373, %v372
        %v406 = vpack.c.b16 %v375, %v374
        %v407 = vpack.c.b16 %v377, %v376
        %v408 = vpack.c.b16 %v379, %v378
        %v409 = vpack.c.b16 %v381, %v380
        %v410 = vpack.c.b16 %v383, %v382
        %v411 = vpack.c.b16 %v385, %v384
        %v412 = vpack.c.b16 %v387, %v386
        %v413 = vpack.c.b16 %v389, %v388
        %v418 = vunpack.c.l.b16 %v290
        %v419 = vunpack.c.h.b16 %v290
        %v420 = vunpack.c.l.b16 %v291
        %v421 = vunpack.c.l.b16 %v292
        %v422 = vunpack.c.h.b16 %v292
        %v423 = vunpack.c.l.b16 %v293
        %v424 = vpack.c.b16 %v421, %v418
        %v425 = vpack.c.b16 %v422, %v419
        %v426 = vpack.c.b16 %v423, %v420
        %vm427 = vcmask 97280
        %v429 = vsel %vm427, %v390, 0
        %v432 = vsel %vm427, %v391, 0
        %v435 = vsel %vm427, %v392, 0
        %v438 = vsel %vm427, %v393, 0
        %v441 = vsel %vm427, %v394, 0
        %v444 = vsel %vm427, %v395, 0
        %v447 = vsel %vm427, %v396, 0
        %v450 = vsel %vm427, %v397, 0
        %v453 = vsel %vm427, %v398, 0
        %v456 = vsel %vm427, %v399, 0
        %v459 = vsel %vm427, %v400, 0
        %v462 = vsel %vm427, %v401, 0
        %v465 = vsel %vm427, %v402, 0
        %v468 = vsel %vm427, %v403, 0
        %v471 = vsel %vm427, %v404, 0
        %v474 = vsel %vm427, %v405, 0
        %v477 = vsel %vm427, %v406, 0
        %v480 = vsel %vm427, %v407, 0
        %v483 = vsel %vm427, %v408, 0
        %v486 = vsel %vm427, %v409, 0
        %v489 = vsel %vm427, %v410, 0
        %v492 = vsel %vm427, %v411, 0
        %v495 = vsel %vm427, %v412, 0
        %v498 = vsel %vm427, %v413, 0
        %vm500 = vcmask 1045504
        %v502 = vsel %vm500, %v424, 0
        %v505 = vsel %vm500, %v425, 0
        %v508 = vsel %vm500, %v426, 0
        %510 = vmatprep.subr.bf16.mxu0 0
        %511 = vmatpush1.bf16.msra.mxu0 0
        %512 = vmatprep.subr.bf16.mxu0 0
        %513 = vmatpush1.bf16.msra.mxu0 0
        %514 = vmatprep.subr.bf16.mxu0 0
        %515 = vmatpush1.bf16.msra.mxu0 0
        %516 = vmatprep.subr.bf16.mxu0 0
        %517 = vmatpush1.bf16.msra.mxu0 0
        %518 = vmatprep.subr.bf16.mxu0 0
        %519 = vmatpush1.bf16.msra.mxu0 0
        %520 = vmatprep.subr.bf16.mxu0 0
        %521 = vmatpush1.bf16.msra.mxu0 0
        %522 = vmatprep.subr.bf16.mxu0 0
        %523 = vmatpush1.bf16.msra.mxu0 0
        %524 = vmatprep.subr.bf16.mxu0 %v505
        %525 = vmatpush1.bf16.msra.mxu0 %v502
        %526 = vmatprep.subr.bf16.mxu0 0
        %527 = vmatpush2.bf16.msra.mxu0 0
        %528 = vmatprep.subr.bf16.mxu0 0
        %529 = vmatpush2.bf16.msra.mxu0 0
        %530 = vmatprep.subr.bf16.mxu0 0
        %531 = vmatpush2.bf16.msra.mxu0 0
        %532 = vmatprep.subr.bf16.mxu0 0
        %533 = vmatpush2.bf16.msra.mxu0 0
        %534 = vmatprep.subr.bf16.mxu0 0
        %535 = vmatpush2.bf16.msra.mxu0 0
        %536 = vmatprep.subr.bf16.mxu0 0
        %537 = vmatpush2.bf16.msra.mxu0 0
        %538 = vmatprep.subr.bf16.mxu0 0
        %539 = vmatpush2.bf16.msra.mxu0 0
        %540 = vmatprep.subr.bf16.mxu0 0
        %541 = vmatpush2.bf16.msra.mxu0 0
        %542 = vmatprep.mubr.bf16.mxu0 0
        %543 = vmatmul.mubr.bf16.gmra.mxu0 %v429
        %v544 = vpop.f32.mrf.mxu0
        %v545 = vadd.f32 0.0, %v544
        %v546 = vpop.f32.mrf.mxu0
        %v547 = vadd.f32 0.0, %v546
        %v548 = vpop.f32.mrf.mxu0
        %v549 = vadd.f32 0.0, %v548
        %v550 = vpop.f32.mrf.mxu0
        %v551 = vadd.f32 0.0, %v550
        %552 = vmatprep.mubr.bf16.mxu0 0
        %553 = vmatmul.mubr.bf16.gmra.mxu0 %v432
        %v554 = vpop.f32.mrf.mxu0
        %v555 = vpop.f32.mrf.mxu0
        %v556 = vadd.f32 0.0, %v555
        %v557 = vpop.f32.mrf.mxu0
        %v558 = vadd.f32 0.0, %v557
        %v559 = vpop.f32.mrf.mxu0
        %v560 = vadd.f32 0.0, %v559
        %561 = vmatprep.mubr.bf16.mxu0 0
        %562 = vmatmul.mubr.bf16.gmra.mxu0 %v435
        %v563 = vpop.f32.mrf.mxu0
        %v564 = vadd.f32 0.0, %v563
        %v565 = vpop.f32.mrf.mxu0
        %v566 = vadd.f32 0.0, %v565
        %v567 = vpop.f32.mrf.mxu0
        %v568 = vpop.f32.mrf.mxu0
        %v569 = vadd.f32 0.0, %v568
        %570 = vmatprep.mubr.bf16.mxu0 0
        %571 = vmatmul.mubr.bf16.gmra.mxu0 %v438
        %v572 = vpop.f32.mrf.mxu0
        %v573 = vadd.f32 0.0, %v572
        %v574 = vpop.f32.mrf.mxu0
        %v575 = vadd.f32 0.0, %v574
        %v576 = vpop.f32.mrf.mxu0
        %v577 = vadd.f32 0.0, %v576
        %v578 = vpop.f32.mrf.mxu0
        %v579 = vadd.f32 0.0, %v578
        %580 = vmatprep.mubr.bf16.mxu0 0
        %581 = vmatmul.mubr.bf16.gmra.mxu0 %v441
        %v582 = vpop.f32.mrf.mxu0
        %v583 = vpop.f32.mrf.mxu0
        %v584 = vadd.f32 0.0, %v583
        %v585 = vpop.f32.mrf.mxu0
        %v586 = vadd.f32 0.0, %v585
        %v587 = vpop.f32.mrf.mxu0
        %v588 = vadd.f32 0.0, %v587
        %589 = vmatprep.mubr.bf16.mxu0 0
        %590 = vmatmul.mubr.bf16.gmra.mxu0 %v444
        %v591 = vpop.f32.mrf.mxu0
        %v592 = vadd.f32 0.0, %v591
        %v593 = vpop.f32.mrf.mxu0
        %v594 = vadd.f32 0.0, %v593
        %v595 = vpop.f32.mrf.mxu0
        %v596 = vpop.f32.mrf.mxu0
        %v597 = vadd.f32 0.0, %v596
        %598 = vmatprep.mubr.bf16.mxu0 0
        %599 = vmatmul.mubr.bf16.gmra.mxu0 %v447
        %v600 = vpop.f32.mrf.mxu0
        %v601 = vadd.f32 0.0, %v600
        %v602 = vpop.f32.mrf.mxu0
        %v603 = vadd.f32 0.0, %v602
        %v604 = vpop.f32.mrf.mxu0
        %v605 = vadd.f32 0.0, %v604
        %v606 = vpop.f32.mrf.mxu0
        %v607 = vadd.f32 0.0, %v606
        %608 = vmatprep.mubr.bf16.mxu0 0
        %609 = vmatmul.mubr.bf16.gmra.mxu0 %v450
        %v610 = vpop.f32.mrf.mxu0
        %v611 = vpop.f32.mrf.mxu0
        %v612 = vadd.f32 0.0, %v611
        %v613 = vpop.f32.mrf.mxu0
        %v614 = vadd.f32 0.0, %v613
        %v615 = vpop.f32.mrf.mxu0
        %v616 = vadd.f32 0.0, %v615
        %617 = vmatprep.mubr.bf16.mxu0 0
        %618 = vmatmul.mubr.bf16.gmra.mxu0 %v453
        %v619 = vpop.f32.mrf.mxu0
        %v620 = vadd.f32 0.0, %v619
        %v621 = vpop.f32.mrf.mxu0
        %v622 = vadd.f32 0.0, %v621
        %v623 = vpop.f32.mrf.mxu0
        %v624 = vpop.f32.mrf.mxu0
        %v625 = vadd.f32 0.0, %v624
        %626 = vmatprep.mubr.bf16.mxu0 0
        %627 = vmatmul.mubr.bf16.gmra.mxu0 %v456
        %v628 = vpop.f32.mrf.mxu0
        %v629 = vadd.f32 0.0, %v628
        %v630 = vpop.f32.mrf.mxu0
        %v631 = vadd.f32 0.0, %v630
        %v632 = vpop.f32.mrf.mxu0
        %v633 = vadd.f32 0.0, %v632
        %v634 = vpop.f32.mrf.mxu0
        %v635 = vadd.f32 0.0, %v634
        %636 = vmatprep.mubr.bf16.mxu0 0
        %637 = vmatmul.mubr.bf16.gmra.mxu0 %v459
        %v638 = vpop.f32.mrf.mxu0
        %v639 = vpop.f32.mrf.mxu0
        %v640 = vadd.f32 0.0, %v639
        %v641 = vpop.f32.mrf.mxu0
        %v642 = vadd.f32 0.0, %v641
        %v643 = vpop.f32.mrf.mxu0
        %v644 = vadd.f32 0.0, %v643
        %645 = vmatprep.mubr.bf16.mxu0 0
        %646 = vmatmul.mubr.bf16.gmra.mxu0 %v462
        %v647 = vpop.f32.mrf.mxu0
        %v648 = vadd.f32 0.0, %v647
        %v649 = vpop.f32.mrf.mxu0
        %v650 = vadd.f32 0.0, %v649
        %v651 = vpop.f32.mrf.mxu0
        %v652 = vpop.f32.mrf.mxu0
        %v653 = vadd.f32 0.0, %v652
        %654 = vmatprep.mubr.bf16.mxu0 0
        %655 = vmatmul.mubr.bf16.gmra.mxu0 %v465
        %v656 = vpop.f32.mrf.mxu0
        %v657 = vadd.f32 0.0, %v656
        %v658 = vpop.f32.mrf.mxu0
        %v659 = vadd.f32 0.0, %v658
        %v660 = vpop.f32.mrf.mxu0
        %v661 = vadd.f32 0.0, %v660
        %v662 = vpop.f32.mrf.mxu0
        %v663 = vadd.f32 0.0, %v662
        %664 = vmatprep.mubr.bf16.mxu0 0
        %665 = vmatmul.mubr.bf16.gmra.mxu0 %v468
        %v666 = vpop.f32.mrf.mxu0
        %v667 = vpop.f32.mrf.mxu0
        %v668 = vadd.f32 0.0, %v667
        %v669 = vpop.f32.mrf.mxu0
        %v670 = vadd.f32 0.0, %v669
        %v671 = vpop.f32.mrf.mxu0
        %v672 = vadd.f32 0.0, %v671
        %673 = vmatprep.mubr.bf16.mxu0 0
        %674 = vmatmul.mubr.bf16.gmra.mxu0 %v471
        %v675 = vpop.f32.mrf.mxu0
        %v676 = vadd.f32 0.0, %v675
        %v677 = vpop.f32.mrf.mxu0
        %v678 = vadd.f32 0.0, %v677
        %v679 = vpop.f32.mrf.mxu0
        %v680 = vpop.f32.mrf.mxu0
        %v681 = vadd.f32 0.0, %v680
        %682 = vmatprep.mubr.bf16.mxu0 0
        %683 = vmatmul.mubr.bf16.gmra.mxu0 %v474
        %v684 = vpop.f32.mrf.mxu0
        %v685 = vadd.f32 0.0, %v684
        %v686 = vpop.f32.mrf.mxu0
        %v687 = vadd.f32 0.0, %v686
        %v688 = vpop.f32.mrf.mxu0
        %v689 = vadd.f32 0.0, %v688
        %v690 = vpop.f32.mrf.mxu0
        %v691 = vadd.f32 0.0, %v690
        %692 = vmatprep.mubr.bf16.mxu0 0
        %693 = vmatmul.mubr.bf16.gmra.mxu0 %v477
        %v694 = vpop.f32.mrf.mxu0
        %v695 = vpop.f32.mrf.mxu0
        %v696 = vadd.f32 0.0, %v695
        %v697 = vpop.f32.mrf.mxu0
        %v698 = vadd.f32 0.0, %v697
        %v699 = vpop.f32.mrf.mxu0
        %v700 = vadd.f32 0.0, %v699
        %701 = vmatprep.mubr.bf16.mxu0 0
        %702 = vmatmul.mubr.bf16.gmra.mxu0 %v480
        %v703 = vpop.f32.mrf.mxu0
        %v704 = vadd.f32 0.0, %v703
        %v705 = vpop.f32.mrf.mxu0
        %v706 = vadd.f32 0.0, %v705
        %v707 = vpop.f32.mrf.mxu0
        %v708 = vpop.f32.mrf.mxu0
        %v709 = vadd.f32 0.0, %v708
        %710 = vmatprep.mubr.bf16.mxu0 0
        %711 = vmatmul.mubr.bf16.gmra.mxu0 %v483
        %v712 = vpop.f32.mrf.mxu0
        %v713 = vadd.f32 0.0, %v712
        %v714 = vpop.f32.mrf.mxu0
        %v715 = vadd.f32 0.0, %v714
        %v716 = vpop.f32.mrf.mxu0
        %v717 = vadd.f32 0.0, %v716
        %v718 = vpop.f32.mrf.mxu0
        %v719 = vadd.f32 0.0, %v718
        %720 = vmatprep.mubr.bf16.mxu0 0
        %721 = vmatmul.mubr.bf16.gmra.mxu0 %v486
        %v722 = vpop.f32.mrf.mxu0
        %v723 = vpop.f32.mrf.mxu0
        %v724 = vadd.f32 0.0, %v723
        %v725 = vpop.f32.mrf.mxu0
        %v726 = vadd.f32 0.0, %v725
        %v727 = vpop.f32.mrf.mxu0
        %v728 = vadd.f32 0.0, %v727
        %729 = vmatprep.mubr.bf16.mxu0 0
        %730 = vmatmul.mubr.bf16.gmra.mxu0 %v489
        %v731 = vpop.f32.mrf.mxu0
        %v732 = vadd.f32 0.0, %v731
        %v733 = vpop.f32.mrf.mxu0
        %v734 = vadd.f32 0.0, %v733
        %v735 = vpop.f32.mrf.mxu0
        %v736 = vpop.f32.mrf.mxu0
        %v737 = vadd.f32 0.0, %v736
        %738 = vmatprep.mubr.bf16.mxu0 0
        %739 = vmatmul.mubr.bf16.gmra.mxu0 %v492
        %v740 = vpop.f32.mrf.mxu0
        %v741 = vadd.f32 0.0, %v740
        %v742 = vpop.f32.mrf.mxu0
        %v743 = vadd.f32 0.0, %v742
        %v744 = vpop.f32.mrf.mxu0
        %v745 = vadd.f32 0.0, %v744
        %v746 = vpop.f32.mrf.mxu0
        %v747 = vadd.f32 0.0, %v746
        %748 = vmatprep.mubr.bf16.mxu0 0
        %749 = vmatmul.mubr.bf16.gmra.mxu0 %v495
        %v750 = vpop.f32.mrf.mxu0
        %v751 = vpop.f32.mrf.mxu0
        %v752 = vadd.f32 0.0, %v751
        %v753 = vpop.f32.mrf.mxu0
        %v754 = vadd.f32 0.0, %v753
        %v755 = vpop.f32.mrf.mxu0
        %v756 = vadd.f32 0.0, %v755
        %757 = vmatprep.mubr.bf16.mxu0 0
        %758 = vmatmul.mubr.bf16.gmra.mxu0 %v498
        %v759 = vpop.f32.mrf.mxu0
        %v760 = vadd.f32 0.0, %v759
        %v761 = vpop.f32.mrf.mxu0
        %v762 = vadd.f32 0.0, %v761
        %v763 = vpop.f32.mrf.mxu0
        %v764 = vpop.f32.mrf.mxu0
        %v765 = vadd.f32 0.0, %v764
        %766 = vdwg.mxu0
        %767 = vmatprep.subr.bf16.mxu0 0
        %768 = vmatpush1.bf16.msra.mxu0 0
        %769 = vmatprep.subr.bf16.mxu0 0
        %770 = vmatpush1.bf16.msra.mxu0 0
        %771 = vmatprep.subr.bf16.mxu0 0
        %772 = vmatpush1.bf16.msra.mxu0 0
        %773 = vmatprep.subr.bf16.mxu0 0
        %774 = vmatpush1.bf16.msra.mxu0 0
        %775 = vmatprep.subr.bf16.mxu0 0
        %776 = vmatpush1.bf16.msra.mxu0 0
        %777 = vmatprep.subr.bf16.mxu0 0
        %778 = vmatpush1.bf16.msra.mxu0 0
        %779 = vmatprep.subr.bf16.mxu0 0
        %780 = vmatpush1.bf16.msra.mxu0 0
        %781 = vmatprep.subr.bf16.mxu0 0
        %782 = vmatpush1.bf16.msra.mxu0 %v508
        %783 = vmatprep.subr.bf16.mxu0 0
        %784 = vmatpush2.bf16.msra.mxu0 0
        %785 = vmatprep.subr.bf16.mxu0 0
        %786 = vmatpush2.bf16.msra.mxu0 0
        %787 = vmatprep.subr.bf16.mxu0 0
        %788 = vmatpush2.bf16.msra.mxu0 0
        %789 = vmatprep.subr.bf16.mxu0 0
        %790 = vmatpush2.bf16.msra.mxu0 0
        %791 = vmatprep.subr.bf16.mxu0 0
        %792 = vmatpush2.bf16.msra.mxu0 0
        %793 = vmatprep.subr.bf16.mxu0 0
        %794 = vmatpush2.bf16.msra.mxu0 0
        %795 = vmatprep.subr.bf16.mxu0 0
        %796 = vmatpush2.bf16.msra.mxu0 0
        %797 = vmatprep.subr.bf16.mxu0 0
        %798 = vmatpush2.bf16.msra.mxu0 0
        %799 = vmatprep.mubr.bf16.mxu0 0
        %800 = vmatmul.mubr.bf16.gmra.mxu0 %v429
        %v801 = vpop.f32.mrf.mxu0
        %v802 = vadd.f32 0.0, %v801
        %v803 = vpop.f32.mrf.mxu0
        %v804 = vpop.f32.mrf.mxu0
        %v805 = vadd.f32 0.0, %v804
        %v806 = vpop.f32.mrf.mxu0
        %807 = vmatprep.mubr.bf16.mxu0 0
        %808 = vmatmul.mubr.bf16.gmra.mxu0 %v432
        %v809 = vpop.f32.mrf.mxu0
        %v810 = vadd.f32 0.0, %v809
        %v811 = vpop.f32.mrf.mxu0
        %v812 = vpop.f32.mrf.mxu0
        %v813 = vadd.f32 0.0, %v812
        %v814 = vpop.f32.mrf.mxu0
        %815 = vmatprep.mubr.bf16.mxu0 0
        %816 = vmatmul.mubr.bf16.gmra.mxu0 %v435
        %v817 = vpop.f32.mrf.mxu0
        %v818 = vadd.f32 0.0, %v817
        %v819 = vpop.f32.mrf.mxu0
        %v820 = vpop.f32.mrf.mxu0
        %v821 = vadd.f32 0.0, %v820
        %v822 = vpop.f32.mrf.mxu0
        %823 = vmatprep.mubr.bf16.mxu0 0
        %824 = vmatmul.mubr.bf16.gmra.mxu0 %v438
        %v825 = vpop.f32.mrf.mxu0
        %v826 = vadd.f32 0.0, %v825
        %v827 = vpop.f32.mrf.mxu0
        %v828 = vpop.f32.mrf.mxu0
        %v829 = vadd.f32 0.0, %v828
        %v830 = vpop.f32.mrf.mxu0
        %831 = vmatprep.mubr.bf16.mxu0 0
        %832 = vmatmul.mubr.bf16.gmra.mxu0 %v441
        %v833 = vpop.f32.mrf.mxu0
        %v834 = vadd.f32 0.0, %v833
        %v835 = vpop.f32.mrf.mxu0
        %v836 = vpop.f32.mrf.mxu0
        %v837 = vadd.f32 0.0, %v836
        %v838 = vpop.f32.mrf.mxu0
        %839 = vmatprep.mubr.bf16.mxu0 0
        %840 = vmatmul.mubr.bf16.gmra.mxu0 %v444
        %v841 = vpop.f32.mrf.mxu0
        %v842 = vadd.f32 0.0, %v841
        %v843 = vpop.f32.mrf.mxu0
        %v844 = vpop.f32.mrf.mxu0
        %v845 = vadd.f32 0.0, %v844
        %v846 = vpop.f32.mrf.mxu0
        %847 = vmatprep.mubr.bf16.mxu0 0
        %848 = vmatmul.mubr.bf16.gmra.mxu0 %v447
        %v849 = vpop.f32.mrf.mxu0
        %v850 = vadd.f32 0.0, %v849
        %v851 = vpop.f32.mrf.mxu0
        %v852 = vpop.f32.mrf.mxu0
        %v853 = vadd.f32 0.0, %v852
        %v854 = vpop.f32.mrf.mxu0
        %855 = vmatprep.mubr.bf16.mxu0 0
        %856 = vmatmul.mubr.bf16.gmra.mxu0 %v450
        %v857 = vpop.f32.mrf.mxu0
        %v858 = vadd.f32 0.0, %v857
        %v859 = vpop.f32.mrf.mxu0
        %v860 = vpop.f32.mrf.mxu0
        %v861 = vadd.f32 0.0, %v860
        %v862 = vpop.f32.mrf.mxu0
        %863 = vmatprep.mubr.bf16.mxu0 0
        %864 = vmatmul.mubr.bf16.gmra.mxu0 %v453
        %v865 = vpop.f32.mrf.mxu0
        %v866 = vadd.f32 0.0, %v865
        %v867 = vpop.f32.mrf.mxu0
        %v868 = vpop.f32.mrf.mxu0
        %v869 = vadd.f32 0.0, %v868
        %v870 = vpop.f32.mrf.mxu0
        %871 = vmatprep.mubr.bf16.mxu0 0
        %872 = vmatmul.mubr.bf16.gmra.mxu0 %v456
        %v873 = vpop.f32.mrf.mxu0
        %v874 = vadd.f32 0.0, %v873
        %v875 = vpop.f32.mrf.mxu0
        %v876 = vpop.f32.mrf.mxu0
        %v877 = vadd.f32 0.0, %v876
        %v878 = vpop.f32.mrf.mxu0
        %879 = vmatprep.mubr.bf16.mxu0 0
        %880 = vmatmul.mubr.bf16.gmra.mxu0 %v459
        %v881 = vpop.f32.mrf.mxu0
        %v882 = vadd.f32 0.0, %v881
        %v883 = vpop.f32.mrf.mxu0
        %v884 = vpop.f32.mrf.mxu0
        %v885 = vadd.f32 0.0, %v884
        %v886 = vpop.f32.mrf.mxu0
        %887 = vmatprep.mubr.bf16.mxu0 0
        %888 = vmatmul.mubr.bf16.gmra.mxu0 %v462
        %v889 = vpop.f32.mrf.mxu0
        %v890 = vadd.f32 0.0, %v889
        %v891 = vpop.f32.mrf.mxu0
        %v892 = vpop.f32.mrf.mxu0
        %v893 = vadd.f32 0.0, %v892
        %v894 = vpop.f32.mrf.mxu0
        %895 = vmatprep.mubr.bf16.mxu0 0
        %896 = vmatmul.mubr.bf16.gmra.mxu0 %v465
        %v897 = vpop.f32.mrf.mxu0
        %v898 = vadd.f32 0.0, %v897
        %v899 = vpop.f32.mrf.mxu0
        %v900 = vpop.f32.mrf.mxu0
        %v901 = vadd.f32 0.0, %v900
        %v902 = vpop.f32.mrf.mxu0
        %903 = vmatprep.mubr.bf16.mxu0 0
        %904 = vmatmul.mubr.bf16.gmra.mxu0 %v468
        %v905 = vpop.f32.mrf.mxu0
        %v906 = vadd.f32 0.0, %v905
        %v907 = vpop.f32.mrf.mxu0
        %v908 = vpop.f32.mrf.mxu0
        %v909 = vadd.f32 0.0, %v908
        %v910 = vpop.f32.mrf.mxu0
        %911 = vmatprep.mubr.bf16.mxu0 0
        %912 = vmatmul.mubr.bf16.gmra.mxu0 %v471
        %v913 = vpop.f32.mrf.mxu0
        %v914 = vadd.f32 0.0, %v913
        %v915 = vpop.f32.mrf.mxu0
        %v916 = vpop.f32.mrf.mxu0
        %v917 = vadd.f32 0.0, %v916
        %v918 = vpop.f32.mrf.mxu0
        %919 = vmatprep.mubr.bf16.mxu0 0
        %920 = vmatmul.mubr.bf16.gmra.mxu0 %v474
        %v921 = vpop.f32.mrf.mxu0
        %v922 = vadd.f32 0.0, %v921
        %v923 = vpop.f32.mrf.mxu0
        %v924 = vpop.f32.mrf.mxu0
        %v925 = vadd.f32 0.0, %v924
        %v926 = vpop.f32.mrf.mxu0
        %927 = vmatprep.mubr.bf16.mxu0 0
        %928 = vmatmul.mubr.bf16.gmra.mxu0 %v477
        %v929 = vpop.f32.mrf.mxu0
        %v930 = vadd.f32 0.0, %v929
        %v931 = vpop.f32.mrf.mxu0
        %v932 = vpop.f32.mrf.mxu0
        %v933 = vadd.f32 0.0, %v932
        %v934 = vpop.f32.mrf.mxu0
        %935 = vmatprep.mubr.bf16.mxu0 0
        %936 = vmatmul.mubr.bf16.gmra.mxu0 %v480
        %v937 = vpop.f32.mrf.mxu0
        %v938 = vadd.f32 0.0, %v937
        %v939 = vpop.f32.mrf.mxu0
        %v940 = vpop.f32.mrf.mxu0
        %v941 = vadd.f32 0.0, %v940
        %v942 = vpop.f32.mrf.mxu0
        %943 = vmatprep.mubr.bf16.mxu0 0
        %944 = vmatmul.mubr.bf16.gmra.mxu0 %v483
        %v945 = vpop.f32.mrf.mxu0
        %v946 = vadd.f32 0.0, %v945
        %v947 = vpop.f32.mrf.mxu0
        %v948 = vpop.f32.mrf.mxu0
        %v949 = vadd.f32 0.0, %v948
        %v950 = vpop.f32.mrf.mxu0
        %951 = vmatprep.mubr.bf16.mxu0 0
        %952 = vmatmul.mubr.bf16.gmra.mxu0 %v486
        %v953 = vpop.f32.mrf.mxu0
        %v954 = vadd.f32 0.0, %v953
        %v955 = vpop.f32.mrf.mxu0
        %v956 = vpop.f32.mrf.mxu0
        %v957 = vadd.f32 0.0, %v956
        %v958 = vpop.f32.mrf.mxu0
        %959 = vmatprep.mubr.bf16.mxu0 0
        %960 = vmatmul.mubr.bf16.gmra.mxu0 %v489
        %v961 = vpop.f32.mrf.mxu0
        %v962 = vadd.f32 0.0, %v961
        %v963 = vpop.f32.mrf.mxu0
        %v964 = vpop.f32.mrf.mxu0
        %v965 = vadd.f32 0.0, %v964
        %v966 = vpop.f32.mrf.mxu0
        %967 = vmatprep.mubr.bf16.mxu0 0
        %968 = vmatmul.mubr.bf16.gmra.mxu0 %v492
        %v969 = vpop.f32.mrf.mxu0
        %v970 = vadd.f32 0.0, %v969
        %v971 = vpop.f32.mrf.mxu0
        %v972 = vpop.f32.mrf.mxu0
        %v973 = vadd.f32 0.0, %v972
        %v974 = vpop.f32.mrf.mxu0
        %975 = vmatprep.mubr.bf16.mxu0 0
        %976 = vmatmul.mubr.bf16.gmra.mxu0 %v495
        %v977 = vpop.f32.mrf.mxu0
        %v978 = vadd.f32 0.0, %v977
        %v979 = vpop.f32.mrf.mxu0
        %v980 = vpop.f32.mrf.mxu0
        %v981 = vadd.f32 0.0, %v980
        %v982 = vpop.f32.mrf.mxu0
        %983 = vmatprep.mubr.bf16.mxu0 0
        %984 = vmatmul.mubr.bf16.gmra.mxu0 %v498
        %v985 = vpop.f32.mrf.mxu0
        %v986 = vadd.f32 0.0, %v985
        %v987 = vpop.f32.mrf.mxu0
        %v988 = vpop.f32.mrf.mxu0
        %v989 = vadd.f32 0.0, %v988
        %v990 = vpop.f32.mrf.mxu0
        %991 = vdwg.mxu0
        %vm1040 = vcmask 1046528
        %v1041 = vrot.slane %v547, 1
        %v1042 = vrot.slane %v551, 1
        %v1043 = vsel %vm1040, %v1041, %v1042
        %v1044 = vrot.slane %v556, 1
        %v1045 = vsel %vm1040, %v1042, %v1044
        %v1046 = vrot.slane %v560, 1
        %v1047 = vrot.slane %v566, 1
        %v1048 = vsel %vm1040, %v1046, %v1047
        %v1049 = vrot.slane %v569, 1
        %v1050 = vsel %vm1040, %v1047, %v1049
        %v1051 = vrot.slane %v575, 1
        %v1052 = vrot.slane %v579, 1
        %v1053 = vsel %vm1040, %v1051, %v1052
        %v1054 = vrot.slane %v584, 1
        %v1055 = vsel %vm1040, %v1052, %v1054
        %v1056 = vrot.slane %v588, 1
        %v1057 = vrot.slane %v594, 1
        %v1058 = vsel %vm1040, %v1056, %v1057
        %v1059 = vrot.slane %v597, 1
        %v1060 = vsel %vm1040, %v1057, %v1059
        %v1061 = vrot.slane %v603, 1
        %v1062 = vrot.slane %v607, 1
        %v1063 = vsel %vm1040, %v1061, %v1062
        %v1064 = vrot.slane %v612, 1
        %v1065 = vsel %vm1040, %v1062, %v1064
        %v1066 = vrot.slane %v616, 1
        %v1067 = vrot.slane %v622, 1
        %v1068 = vsel %vm1040, %v1066, %v1067
        %v1069 = vrot.slane %v625, 1
        %v1070 = vsel %vm1040, %v1067, %v1069
        %v1071 = vrot.slane %v631, 1
        %v1072 = vrot.slane %v635, 1
        %v1073 = vsel %vm1040, %v1071, %v1072
        %v1074 = vrot.slane %v640, 1
        %v1075 = vsel %vm1040, %v1072, %v1074
        %v1076 = vrot.slane %v644, 1
        %v1077 = vrot.slane %v650, 1
        %v1078 = vsel %vm1040, %v1076, %v1077
        %v1079 = vrot.slane %v653, 1
        %v1080 = vsel %vm1040, %v1077, %v1079
        %v1081 = vrot.slane %v659, 1
        %v1082 = vrot.slane %v663, 1
        %v1083 = vsel %vm1040, %v1081, %v1082
        %v1084 = vrot.slane %v668, 1
        %v1085 = vsel %vm1040, %v1082, %v1084
        %v1086 = vrot.slane %v672, 1
        %v1087 = vrot.slane %v678, 1
        %v1088 = vsel %vm1040, %v1086, %v1087
        %v1089 = vrot.slane %v681, 1
        %v1090 = vsel %vm1040, %v1087, %v1089
        %v1091 = vrot.slane %v687, 1
        %v1092 = vrot.slane %v691, 1
        %v1093 = vsel %vm1040, %v1091, %v1092
        %v1094 = vrot.slane %v696, 1
        %v1095 = vsel %vm1040, %v1092, %v1094
        %v1096 = vrot.slane %v700, 1
        %v1097 = vrot.slane %v706, 1
        %v1098 = vsel %vm1040, %v1096, %v1097
        %v1099 = vrot.slane %v709, 1
        %v1100 = vsel %vm1040, %v1097, %v1099
        %v1101 = vrot.slane %v715, 1
        %v1102 = vrot.slane %v719, 1
        %v1103 = vsel %vm1040, %v1101, %v1102
        %v1104 = vrot.slane %v724, 1
        %v1105 = vsel %vm1040, %v1102, %v1104
        %v1106 = vrot.slane %v728, 1
        %v1107 = vrot.slane %v734, 1
        %v1108 = vsel %vm1040, %v1106, %v1107
        %v1109 = vrot.slane %v737, 1
        %v1110 = vsel %vm1040, %v1107, %v1109
        %v1111 = vrot.slane %v743, 1
        %v1112 = vrot.slane %v747, 1
        %v1113 = vsel %vm1040, %v1111, %v1112
        %v1114 = vrot.slane %v752, 1
        %v1115 = vsel %vm1040, %v1112, %v1114
        %v1116 = vrot.slane %v756, 1
        %v1117 = vrot.slane %v762, 1
        %v1118 = vsel %vm1040, %v1116, %v1117
        %v1119 = vrot.slane %v765, 1
        %v1120 = vsel %vm1040, %v1117, %v1119
        %v1153 = vadd.f32 %v545, %v1043
        %v1154 = vadd.f32 %v549, %v1045
        %v1155 = vadd.f32 %v558, %v1048
        %v1156 = vadd.f32 %v564, %v1050
        %v1157 = vadd.f32 %v573, %v1053
        %v1158 = vadd.f32 %v577, %v1055
        %v1159 = vadd.f32 %v586, %v1058
        %v1160 = vadd.f32 %v592, %v1060
        %v1161 = vadd.f32 %v601, %v1063
        %v1162 = vadd.f32 %v605, %v1065
        %v1163 = vadd.f32 %v614, %v1068
        %v1164 = vadd.f32 %v620, %v1070
        %v1165 = vadd.f32 %v629, %v1073
        %v1166 = vadd.f32 %v633, %v1075
        %v1167 = vadd.f32 %v642, %v1078
        %v1168 = vadd.f32 %v648, %v1080
        %v1169 = vadd.f32 %v657, %v1083
        %v1170 = vadd.f32 %v661, %v1085
        %v1171 = vadd.f32 %v670, %v1088
        %v1172 = vadd.f32 %v676, %v1090
        %v1173 = vadd.f32 %v685, %v1093
        %v1174 = vadd.f32 %v689, %v1095
        %v1175 = vadd.f32 %v698, %v1098
        %v1176 = vadd.f32 %v704, %v1100
        %v1177 = vadd.f32 %v713, %v1103
        %v1178 = vadd.f32 %v717, %v1105
        %v1179 = vadd.f32 %v726, %v1108
        %v1180 = vadd.f32 %v732, %v1110
        %v1181 = vadd.f32 %v741, %v1113
        %v1182 = vadd.f32 %v745, %v1115
        %v1183 = vadd.f32 %v754, %v1118
        %v1184 = vadd.f32 %v760, %v1120
        %v1233 = vrot.slane %v802, 2
        %v1234 = vrot.slane %v805, 2
        %v1235 = vsel %vm500, %v1233, %v1234
        %v1236 = vrot.slane %v810, 2
        %v1237 = vsel %vm500, %v1234, %v1236
        %v1238 = vrot.slane %v813, 2
        %v1239 = vrot.slane %v818, 2
        %v1240 = vsel %vm500, %v1238, %v1239
        %v1241 = vrot.slane %v821, 2
        %v1242 = vsel %vm500, %v1239, %v1241
        %v1243 = vrot.slane %v826, 2
        %v1244 = vrot.slane %v829, 2
        %v1245 = vsel %vm500, %v1243, %v1244
        %v1246 = vrot.slane %v834, 2
        %v1247 = vsel %vm500, %v1244, %v1246
        %v1248 = vrot.slane %v837, 2
        %v1249 = vrot.slane %v842, 2
        %v1250 = vsel %vm500, %v1248, %v1249
        %v1251 = vrot.slane %v845, 2
        %v1252 = vsel %vm500, %v1249, %v1251
        %v1253 = vrot.slane %v850, 2
        %v1254 = vrot.slane %v853, 2
        %v1255 = vsel %vm500, %v1253, %v1254
        %v1256 = vrot.slane %v858, 2
        %v1257 = vsel %vm500, %v1254, %v1256
        %v1258 = vrot.slane %v861, 2
        %v1259 = vrot.slane %v866, 2
        %v1260 = vsel %vm500, %v1258, %v1259
        %v1261 = vrot.slane %v869, 2
        %v1262 = vsel %vm500, %v1259, %v1261
        %v1263 = vrot.slane %v874, 2
        %v1264 = vrot.slane %v877, 2
        %v1265 = vsel %vm500, %v1263, %v1264
        %v1266 = vrot.slane %v882, 2
        %v1267 = vsel %vm500, %v1264, %v1266
        %v1268 = vrot.slane %v885, 2
        %v1269 = vrot.slane %v890, 2
        %v1270 = vsel %vm500, %v1268, %v1269
        %v1271 = vrot.slane %v893, 2
        %v1272 = vsel %vm500, %v1269, %v1271
        %v1273 = vrot.slane %v898, 2
        %v1274 = vrot.slane %v901, 2
        %v1275 = vsel %vm500, %v1273, %v1274
        %v1276 = vrot.slane %v906, 2
        %v1277 = vsel %vm500, %v1274, %v1276
        %v1278 = vrot.slane %v909, 2
        %v1279 = vrot.slane %v914, 2
        %v1280 = vsel %vm500, %v1278, %v1279
        %v1281 = vrot.slane %v917, 2
        %v1282 = vsel %vm500, %v1279, %v1281
        %v1283 = vrot.slane %v922, 2
        %v1284 = vrot.slane %v925, 2
        %v1285 = vsel %vm500, %v1283, %v1284
        %v1286 = vrot.slane %v930, 2
        %v1287 = vsel %vm500, %v1284, %v1286
        %v1288 = vrot.slane %v933, 2
        %v1289 = vrot.slane %v938, 2
        %v1290 = vsel %vm500, %v1288, %v1289
        %v1291 = vrot.slane %v941, 2
        %v1292 = vsel %vm500, %v1289, %v1291
        %v1293 = vrot.slane %v946, 2
        %v1294 = vrot.slane %v949, 2
        %v1295 = vsel %vm500, %v1293, %v1294
        %v1296 = vrot.slane %v954, 2
        %v1297 = vsel %vm500, %v1294, %v1296
        %v1298 = vrot.slane %v957, 2
        %v1299 = vrot.slane %v962, 2
        %v1300 = vsel %vm500, %v1298, %v1299
        %v1301 = vrot.slane %v965, 2
        %v1302 = vsel %vm500, %v1299, %v1301
        %v1303 = vrot.slane %v970, 2
        %v1304 = vrot.slane %v973, 2
        %v1305 = vsel %vm500, %v1303, %v1304
        %v1306 = vrot.slane %v978, 2
        %v1307 = vsel %vm500, %v1304, %v1306
        %v1308 = vrot.slane %v981, 2
        %v1309 = vrot.slane %v986, 2
        %v1310 = vsel %vm500, %v1308, %v1309
        %v1311 = vrot.slane %v989, 2
        %v1312 = vsel %vm500, %v1309, %v1311
        %v1345 = vadd.f32 %v1153, %v1235
        %v1346 = vadd.f32 %v1154, %v1237
        %v1347 = vadd.f32 %v1155, %v1240
        %v1348 = vadd.f32 %v1156, %v1242
        %v1349 = vadd.f32 %v1157, %v1245
        %v1350 = vadd.f32 %v1158, %v1247
        %v1351 = vadd.f32 %v1159, %v1250
        %v1352 = vadd.f32 %v1160, %v1252
        %v1353 = vadd.f32 %v1161, %v1255
        %v1354 = vadd.f32 %v1162, %v1257
        %v1355 = vadd.f32 %v1163, %v1260
        %v1356 = vadd.f32 %v1164, %v1262
        %v1357 = vadd.f32 %v1165, %v1265
        %v1358 = vadd.f32 %v1166, %v1267
        %v1359 = vadd.f32 %v1167, %v1270
        %v1360 = vadd.f32 %v1168, %v1272
        %v1361 = vadd.f32 %v1169, %v1275
        %v1362 = vadd.f32 %v1170, %v1277
        %v1363 = vadd.f32 %v1171, %v1280
        %v1364 = vadd.f32 %v1172, %v1282
        %v1365 = vadd.f32 %v1173, %v1285
        %v1366 = vadd.f32 %v1174, %v1287
        %v1367 = vadd.f32 %v1175, %v1290
        %v1368 = vadd.f32 %v1176, %v1292
        %v1369 = vadd.f32 %v1177, %v1295
        %v1370 = vadd.f32 %v1178, %v1297
        %v1371 = vadd.f32 %v1179, %v1300
        %v1372 = vadd.f32 %v1180, %v1302
        %v1373 = vadd.f32 %v1181, %v1305
        %v1374 = vadd.f32 %v1182, %v1307
        %v1375 = vadd.f32 %v1183, %v1310
        %v1376 = vadd.f32 %v1184, %v1312
        %v1377 = vld [vmem:[%s2] sm:$0x1]
        %v1378 = vlaneseq
        %v1379 = vshrl.u32 %v1378, 7
        %v1380 = vsub.s32 0, %v1379
        %v1381 = vrot.slane %v1377, %v1380
        %v1382 = vadd.f32 %v1345, %v1381
        %v1383 = vadd.f32 %v1346, %v1381
        %v1384 = vadd.f32 %v1347, %v1381
        %v1385 = vadd.f32 %v1348, %v1381
        %v1386 = vadd.f32 %v1349, %v1381
        %v1387 = vadd.f32 %v1350, %v1381
        %v1388 = vadd.f32 %v1351, %v1381
        %v1389 = vadd.f32 %v1352, %v1381
        %v1390 = vadd.f32 %v1353, %v1381
        %v1391 = vadd.f32 %v1354, %v1381
        %v1392 = vadd.f32 %v1355, %v1381
        %v1393 = vadd.f32 %v1356, %v1381
        %v1394 = vadd.f32 %v1357, %v1381
        %v1395 = vadd.f32 %v1358, %v1381
        %v1396 = vadd.f32 %v1359, %v1381
        %v1397 = vadd.f32 %v1360, %v1381
        %v1398 = vadd.f32 %v1361, %v1381
        %v1399 = vadd.f32 %v1362, %v1381
        %v1400 = vadd.f32 %v1363, %v1381
        %v1401 = vadd.f32 %v1364, %v1381
        %v1402 = vadd.f32 %v1365, %v1381
        %v1403 = vadd.f32 %v1366, %v1381
        %v1404 = vadd.f32 %v1367, %v1381
        %v1405 = vadd.f32 %v1368, %v1381
        %v1406 = vadd.f32 %v1369, %v1381
        %v1407 = vadd.f32 %v1370, %v1381
        %v1408 = vadd.f32 %v1371, %v1381
        %v1409 = vadd.f32 %v1372, %v1381
        %v1410 = vadd.f32 %v1373, %v1381
        %v1411 = vadd.f32 %v1374, %v1381
        %v1412 = vadd.f32 %v1375, %v1381
        %v1413 = vadd.f32 %v1376, %v1381
        %1414 = vadd.xlane.f32.xlu0 %v1382
        %v1415 = vpop.xlane.xlu0 %1414
        %1416 = vadd.xlane.f32.xlu0 %v1383
        %v1417 = vpop.xlane.xlu0 %1416
        %1418 = vadd.xlane.f32.xlu0 %v1384
        %v1419 = vpop.xlane.xlu0 %1418
        %1420 = vadd.xlane.f32.xlu0 %v1385
        %v1421 = vpop.xlane.xlu0 %1420
        %1422 = vadd.xlane.f32.xlu0 %v1386
        %v1423 = vpop.xlane.xlu0 %1422
        %1424 = vadd.xlane.f32.xlu0 %v1387
        %v1425 = vpop.xlane.xlu0 %1424
        %1426 = vadd.xlane.f32.xlu0 %v1388
        %v1427 = vpop.xlane.xlu0 %1426
        %1428 = vadd.xlane.f32.xlu0 %v1389
        %v1429 = vpop.xlane.xlu0 %1428
        %1430 = vadd.xlane.f32.xlu0 %v1390
        %v1431 = vpop.xlane.xlu0 %1430
        %1432 = vadd.xlane.f32.xlu0 %v1391
        %v1433 = vpop.xlane.xlu0 %1432
        %1434 = vadd.xlane.f32.xlu0 %v1392
        %v1435 = vpop.xlane.xlu0 %1434
        %1436 = vadd.xlane.f32.xlu0 %v1393
        %v1437 = vpop.xlane.xlu0 %1436
        %1438 = vadd.xlane.f32.xlu0 %v1394
        %v1439 = vpop.xlane.xlu0 %1438
        %1440 = vadd.xlane.f32.xlu0 %v1395
        %v1441 = vpop.xlane.xlu0 %1440
        %1442 = vadd.xlane.f32.xlu0 %v1396
        %v1443 = vpop.xlane.xlu0 %1442
        %1444 = vadd.xlane.f32.xlu0 %v1397
        %v1445 = vpop.xlane.xlu0 %1444
        %1446 = vadd.xlane.f32.xlu0 %v1398
        %v1447 = vpop.xlane.xlu0 %1446
        %1448 = vadd.xlane.f32.xlu0 %v1399
        %v1449 = vpop.xlane.xlu0 %1448
        %1450 = vadd.xlane.f32.xlu0 %v1400
        %v1451 = vpop.xlane.xlu0 %1450
        %1452 = vadd.xlane.f32.xlu0 %v1401
        %v1453 = vpop.xlane.xlu0 %1452
        %1454 = vadd.xlane.f32.xlu0 %v1402
        %v1455 = vpop.xlane.xlu0 %1454
        %1456 = vadd.xlane.f32.xlu0 %v1403
        %v1457 = vpop.xlane.xlu0 %1456
        %1458 = vadd.xlane.f32.xlu0 %v1404
        %v1459 = vpop.xlane.xlu0 %1458
        %1460 = vadd.xlane.f32.xlu0 %v1405
        %v1461 = vpop.xlane.xlu0 %1460
        %1462 = vadd.xlane.f32.xlu0 %v1406
        %v1463 = vpop.xlane.xlu0 %1462
        %1464 = vadd.xlane.f32.xlu0 %v1407
        %v1465 = vpop.xlane.xlu0 %1464
        %1466 = vadd.xlane.f32.xlu0 %v1408
        %v1467 = vpop.xlane.xlu0 %1466
        %1468 = vadd.xlane.f32.xlu0 %v1409
        %v1469 = vpop.xlane.xlu0 %1468
        %1470 = vadd.xlane.f32.xlu0 %v1410
        %v1471 = vpop.xlane.xlu0 %1470
        %1472 = vadd.xlane.f32.xlu0 %v1411
        %v1473 = vpop.xlane.xlu0 %1472
        %1474 = vadd.xlane.f32.xlu0 %v1412
        %v1475 = vpop.xlane.xlu0 %1474
        %1476 = vadd.xlane.f32.xlu0 %v1413
        %v1477 = vpop.xlane.xlu0 %1476
        %v1478 = vmul.f32 %v1415, 0.125
        %v1479 = vmul.f32 %v1417, 0.125
        %v1480 = vmul.f32 %v1419, 0.125
        %v1481 = vmul.f32 %v1421, 0.125
        %v1482 = vmul.f32 %v1423, 0.125
        %v1483 = vmul.f32 %v1425, 0.125
        %v1484 = vmul.f32 %v1427, 0.125
        %v1485 = vmul.f32 %v1429, 0.125
        %v1486 = vmul.f32 %v1431, 0.125
        %v1487 = vmul.f32 %v1433, 0.125
        %v1488 = vmul.f32 %v1435, 0.125
        %v1489 = vmul.f32 %v1437, 0.125
        %v1490 = vmul.f32 %v1439, 0.125
        %v1491 = vmul.f32 %v1441, 0.125
        %v1492 = vmul.f32 %v1443, 0.125
        %v1493 = vmul.f32 %v1445, 0.125
        %v1494 = vmul.f32 %v1447, 0.125
        %v1495 = vmul.f32 %v1449, 0.125
        %v1496 = vmul.f32 %v1451, 0.125
        %v1497 = vmul.f32 %v1453, 0.125
        %v1498 = vmul.f32 %v1455, 0.125
        %v1499 = vmul.f32 %v1457, 0.125
        %v1500 = vmul.f32 %v1459, 0.125
        %v1501 = vmul.f32 %v1461, 0.125
        %v1502 = vmul.f32 %v1463, 0.125
        %v1503 = vmul.f32 %v1465, 0.125
        %v1504 = vmul.f32 %v1467, 0.125
        %v1505 = vmul.f32 %v1469, 0.125
        %v1506 = vmul.f32 %v1471, 0.125
        %v1507 = vmul.f32 %v1473, 0.125
        %v1508 = vmul.f32 %v1475, 0.125
        %v1509 = vmul.f32 %v1477, 0.125
        %v1510 = vsub.f32 %v1382, %v1478
        %v1511 = vsub.f32 %v1383, %v1479
        %v1512 = vsub.f32 %v1384, %v1480
        %v1513 = vsub.f32 %v1385, %v1481
        %v1514 = vsub.f32 %v1386, %v1482
        %v1515 = vsub.f32 %v1387, %v1483
        %v1516 = vsub.f32 %v1388, %v1484
        %v1517 = vsub.f32 %v1389, %v1485
        %v1518 = vsub.f32 %v1390, %v1486
        %v1519 = vsub.f32 %v1391, %v1487
        %v1520 = vsub.f32 %v1392, %v1488
        %v1521 = vsub.f32 %v1393, %v1489
        %v1522 = vsub.f32 %v1394, %v1490
        %v1523 = vsub.f32 %v1395, %v1491
        %v1524 = vsub.f32 %v1396, %v1492
        %v1525 = vsub.f32 %v1397, %v1493
        %v1526 = vsub.f32 %v1398, %v1494
        %v1527 = vsub.f32 %v1399, %v1495
        %v1528 = vsub.f32 %v1400, %v1496
        %v1529 = vsub.f32 %v1401, %v1497
        %v1530 = vsub.f32 %v1402, %v1498
        %v1531 = vsub.f32 %v1403, %v1499
        %v1532 = vsub.f32 %v1404, %v1500
        %v1533 = vsub.f32 %v1405, %v1501
        %v1534 = vsub.f32 %v1406, %v1502
        %v1535 = vsub.f32 %v1407, %v1503
        %v1536 = vsub.f32 %v1408, %v1504
        %v1537 = vsub.f32 %v1409, %v1505
        %v1538 = vsub.f32 %v1410, %v1506
        %v1539 = vsub.f32 %v1411, %v1507
        %v1540 = vsub.f32 %v1412, %v1508
        %v1541 = vsub.f32 %v1413, %v1509
        %v1542 = vld [vmem:[%s2 + $0x3] sm:$0x1]
        %v1543 = vlaneseq
        %v1544 = vshrl.u32 %v1543, 7
        %v1545 = vsub.s32 0, %v1544
        %v1546 = vrot.slane %v1542, %v1545
        %v1547 = vmul.f32 %v1510, %v1546
        %v1548 = vmul.f32 %v1511, %v1546
        %v1549 = vmul.f32 %v1512, %v1546
        %v1550 = vmul.f32 %v1513, %v1546
        %v1551 = vmul.f32 %v1514, %v1546
        %v1552 = vmul.f32 %v1515, %v1546
        %v1553 = vmul.f32 %v1516, %v1546
        %v1554 = vmul.f32 %v1517, %v1546
        %v1555 = vmul.f32 %v1518, %v1546
        %v1556 = vmul.f32 %v1519, %v1546
        %v1557 = vmul.f32 %v1520, %v1546
        %v1558 = vmul.f32 %v1521, %v1546
        %v1559 = vmul.f32 %v1522, %v1546
        %v1560 = vmul.f32 %v1523, %v1546
        %v1561 = vmul.f32 %v1524, %v1546
        %v1562 = vmul.f32 %v1525, %v1546
        %v1563 = vmul.f32 %v1526, %v1546
        %v1564 = vmul.f32 %v1527, %v1546
        %v1565 = vmul.f32 %v1528, %v1546
        %v1566 = vmul.f32 %v1529, %v1546
        %v1567 = vmul.f32 %v1530, %v1546
        %v1568 = vmul.f32 %v1531, %v1546
        %v1569 = vmul.f32 %v1532, %v1546
        %v1570 = vmul.f32 %v1533, %v1546
        %v1571 = vmul.f32 %v1534, %v1546
        %v1572 = vmul.f32 %v1535, %v1546
        %v1573 = vmul.f32 %v1536, %v1546
        %v1574 = vmul.f32 %v1537, %v1546
        %v1575 = vmul.f32 %v1538, %v1546
        %v1576 = vmul.f32 %v1539, %v1546
        %v1577 = vmul.f32 %v1540, %v1546
        %v1578 = vmul.f32 %v1541, %v1546
        %v1579 = vmul.f32 %v1547, %v1547
        %v1580 = vmul.f32 %v1548, %v1548
        %v1581 = vmul.f32 %v1549, %v1549
        %v1582 = vmul.f32 %v1550, %v1550
        %v1583 = vmul.f32 %v1551, %v1551
        %v1584 = vmul.f32 %v1552, %v1552
        %v1585 = vmul.f32 %v1553, %v1553
        %v1586 = vmul.f32 %v1554, %v1554
        %v1587 = vmul.f32 %v1555, %v1555
        %v1588 = vmul.f32 %v1556, %v1556
        %v1589 = vmul.f32 %v1557, %v1557
        %v1590 = vmul.f32 %v1558, %v1558
        %v1591 = vmul.f32 %v1559, %v1559
        %v1592 = vmul.f32 %v1560, %v1560
        %v1593 = vmul.f32 %v1561, %v1561
        %v1594 = vmul.f32 %v1562, %v1562
        %v1595 = vmul.f32 %v1563, %v1563
        %v1596 = vmul.f32 %v1564, %v1564
        %v1597 = vmul.f32 %v1565, %v1565
        %v1598 = vmul.f32 %v1566, %v1566
        %v1599 = vmul.f32 %v1567, %v1567
        %v1600 = vmul.f32 %v1568, %v1568
        %v1601 = vmul.f32 %v1569, %v1569
        %v1602 = vmul.f32 %v1570, %v1570
        %v1603 = vmul.f32 %v1571, %v1571
        %v1604 = vmul.f32 %v1572, %v1572
        %v1605 = vmul.f32 %v1573, %v1573
        %v1606 = vmul.f32 %v1574, %v1574
        %v1607 = vmul.f32 %v1575, %v1575
        %v1608 = vmul.f32 %v1576, %v1576
        %v1609 = vmul.f32 %v1577, %v1577
        %v1610 = vmul.f32 %v1578, %v1578
        %1611 = vadd.xlane.f32.xlu0 %v1579
        %v1612 = vpop.xlane.xlu0 %1611
        %1613 = vadd.xlane.f32.xlu0 %v1580
        %v1614 = vpop.xlane.xlu0 %1613
        %1615 = vadd.xlane.f32.xlu0 %v1581
        %v1616 = vpop.xlane.xlu0 %1615
        %1617 = vadd.xlane.f32.xlu0 %v1582
        %v1618 = vpop.xlane.xlu0 %1617
        %1619 = vadd.xlane.f32.xlu0 %v1583
        %v1620 = vpop.xlane.xlu0 %1619
        %1621 = vadd.xlane.f32.xlu0 %v1584
        %v1622 = vpop.xlane.xlu0 %1621
        %1623 = vadd.xlane.f32.xlu0 %v1585
        %v1624 = vpop.xlane.xlu0 %1623
        %1625 = vadd.xlane.f32.xlu0 %v1586
        %v1626 = vpop.xlane.xlu0 %1625
        %1627 = vadd.xlane.f32.xlu0 %v1587
        %v1628 = vpop.xlane.xlu0 %1627
        %1629 = vadd.xlane.f32.xlu0 %v1588
        %v1630 = vpop.xlane.xlu0 %1629
        %1631 = vadd.xlane.f32.xlu0 %v1589
        %v1632 = vpop.xlane.xlu0 %1631
        %1633 = vadd.xlane.f32.xlu0 %v1590
        %v1634 = vpop.xlane.xlu0 %1633
        %1635 = vadd.xlane.f32.xlu0 %v1591
        %v1636 = vpop.xlane.xlu0 %1635
        %1637 = vadd.xlane.f32.xlu0 %v1592
        %v1638 = vpop.xlane.xlu0 %1637
        %1639 = vadd.xlane.f32.xlu0 %v1593
        %v1640 = vpop.xlane.xlu0 %1639
        %1641 = vadd.xlane.f32.xlu0 %v1594
        %v1642 = vpop.xlane.xlu0 %1641
        %1643 = vadd.xlane.f32.xlu0 %v1595
        %v1644 = vpop.xlane.xlu0 %1643
        %1645 = vadd.xlane.f32.xlu0 %v1596
        %v1646 = vpop.xlane.xlu0 %1645
        %1647 = vadd.xlane.f32.xlu0 %v1597
        %v1648 = vpop.xlane.xlu0 %1647
        %1649 = vadd.xlane.f32.xlu0 %v1598
        %v1650 = vpop.xlane.xlu0 %1649
        %1651 = vadd.xlane.f32.xlu0 %v1599
        %v1652 = vpop.xlane.xlu0 %1651
        %1653 = vadd.xlane.f32.xlu0 %v1600
        %v1654 = vpop.xlane.xlu0 %1653
        %1655 = vadd.xlane.f32.xlu0 %v1601
        %v1656 = vpop.xlane.xlu0 %1655
        %1657 = vadd.xlane.f32.xlu0 %v1602
        %v1658 = vpop.xlane.xlu0 %1657
        %1659 = vadd.xlane.f32.xlu0 %v1603
        %v1660 = vpop.xlane.xlu0 %1659
        %1661 = vadd.xlane.f32.xlu0 %v1604
        %v1662 = vpop.xlane.xlu0 %1661
        %1663 = vadd.xlane.f32.xlu0 %v1605
        %v1664 = vpop.xlane.xlu0 %1663
        %1665 = vadd.xlane.f32.xlu0 %v1606
        %v1666 = vpop.xlane.xlu0 %1665
        %1667 = vadd.xlane.f32.xlu0 %v1607
        %v1668 = vpop.xlane.xlu0 %1667
        %1669 = vadd.xlane.f32.xlu0 %v1608
        %v1670 = vpop.xlane.xlu0 %1669
        %1671 = vadd.xlane.f32.xlu0 %v1609
        %v1672 = vpop.xlane.xlu0 %1671
        %1673 = vadd.xlane.f32.xlu0 %v1610
        %v1674 = vpop.xlane.xlu0 %1673
        %v1675 = vmul.f32 %v1612, 0.125
        %v1676 = vmul.f32 %v1614, 0.125
        %v1677 = vmul.f32 %v1616, 0.125
        %v1678 = vmul.f32 %v1618, 0.125
        %v1679 = vmul.f32 %v1620, 0.125
        %v1680 = vmul.f32 %v1622, 0.125
        %v1681 = vmul.f32 %v1624, 0.125
        %v1682 = vmul.f32 %v1626, 0.125
        %v1683 = vmul.f32 %v1628, 0.125
        %v1684 = vmul.f32 %v1630, 0.125
        %v1685 = vmul.f32 %v1632, 0.125
        %v1686 = vmul.f32 %v1634, 0.125
        %v1687 = vmul.f32 %v1636, 0.125
        %v1688 = vmul.f32 %v1638, 0.125
        %v1689 = vmul.f32 %v1640, 0.125
        %v1690 = vmul.f32 %v1642, 0.125
        %v1691 = vmul.f32 %v1644, 0.125
        %v1692 = vmul.f32 %v1646, 0.125
        %v1693 = vmul.f32 %v1648, 0.125
        %v1694 = vmul.f32 %v1650, 0.125
        %v1695 = vmul.f32 %v1652, 0.125
        %v1696 = vmul.f32 %v1654, 0.125
        %v1697 = vmul.f32 %v1656, 0.125
        %v1698 = vmul.f32 %v1658, 0.125
        %v1699 = vmul.f32 %v1660, 0.125
        %v1700 = vmul.f32 %v1662, 0.125
        %v1701 = vmul.f32 %v1664, 0.125
        %v1702 = vmul.f32 %v1666, 0.125
        %v1703 = vmul.f32 %v1668, 0.125
        %v1704 = vmul.f32 %v1670, 0.125
        %v1705 = vmul.f32 %v1672, 0.125
        %v1706 = vmul.f32 %v1674, 0.125
        %v1707 = vadd.f32 %v1675, 1e-06
        %v1708 = vadd.f32 %v1676, 1e-06
        %v1709 = vadd.f32 %v1677, 1e-06
        %v1710 = vadd.f32 %v1678, 1e-06
        %v1711 = vadd.f32 %v1679, 1e-06
        %v1712 = vadd.f32 %v1680, 1e-06
        %v1713 = vadd.f32 %v1681, 1e-06
        %v1714 = vadd.f32 %v1682, 1e-06
        %v1715 = vadd.f32 %v1683, 1e-06
        %v1716 = vadd.f32 %v1684, 1e-06
        %v1717 = vadd.f32 %v1685, 1e-06
        %v1718 = vadd.f32 %v1686, 1e-06
        %v1719 = vadd.f32 %v1687, 1e-06
        %v1720 = vadd.f32 %v1688, 1e-06
        %v1721 = vadd.f32 %v1689, 1e-06
        %v1722 = vadd.f32 %v1690, 1e-06
        %v1723 = vadd.f32 %v1691, 1e-06
        %v1724 = vadd.f32 %v1692, 1e-06
        %v1725 = vadd.f32 %v1693, 1e-06
        %v1726 = vadd.f32 %v1694, 1e-06
        %v1727 = vadd.f32 %v1695, 1e-06
        %v1728 = vadd.f32 %v1696, 1e-06
        %v1729 = vadd.f32 %v1697, 1e-06
        %v1730 = vadd.f32 %v1698, 1e-06
        %v1731 = vadd.f32 %v1699, 1e-06
        %v1732 = vadd.f32 %v1700, 1e-06
        %v1733 = vadd.f32 %v1701, 1e-06
        %v1734 = vadd.f32 %v1702, 1e-06
        %v1735 = vadd.f32 %v1703, 1e-06
        %v1736 = vadd.f32 %v1704, 1e-06
        %v1737 = vadd.f32 %v1705, 1e-06
        %v1738 = vadd.f32 %v1706, 1e-06
        %v1739 = vrsqrt.pop %v1707
        %v1740 = vrsqrt.pop %v1708
        %v1741 = vrsqrt.pop %v1709
        %v1742 = vrsqrt.pop %v1710
        %v1743 = vrsqrt.pop %v1711
        %v1744 = vrsqrt.pop %v1712
        %v1745 = vrsqrt.pop %v1713
        %v1746 = vrsqrt.pop %v1714
        %v1747 = vrsqrt.pop %v1715
        %v1748 = vrsqrt.pop %v1716
        %v1749 = vrsqrt.pop %v1717
        %v1750 = vrsqrt.pop %v1718
        %v1751 = vrsqrt.pop %v1719
        %v1752 = vrsqrt.pop %v1720
        %v1753 = vrsqrt.pop %v1721
        %v1754 = vrsqrt.pop %v1722
        %v1755 = vrsqrt.pop %v1723
        %v1756 = vrsqrt.pop %v1724
        %v1757 = vrsqrt.pop %v1725
        %v1758 = vrsqrt.pop %v1726
        %v1759 = vrsqrt.pop %v1727
        %v1760 = vrsqrt.pop %v1728
        %v1761 = vrsqrt.pop %v1729
        %v1762 = vrsqrt.pop %v1730
        %v1763 = vrsqrt.pop %v1731
        %v1764 = vrsqrt.pop %v1732
        %v1765 = vrsqrt.pop %v1733
        %v1766 = vrsqrt.pop %v1734
        %v1767 = vrsqrt.pop %v1735
        %v1768 = vrsqrt.pop %v1736
        %v1769 = vrsqrt.pop %v1737
        %v1770 = vrsqrt.pop %v1738
        %v1771 = vmul.f32 %v1547, %v1739
        %v1772 = vmul.f32 %v1548, %v1740
        %v1773 = vmul.f32 %v1549, %v1741
        %v1774 = vmul.f32 %v1550, %v1742
        %v1775 = vmul.f32 %v1551, %v1743
        %v1776 = vmul.f32 %v1552, %v1744
        %v1777 = vmul.f32 %v1553, %v1745
        %v1778 = vmul.f32 %v1554, %v1746
        %v1779 = vmul.f32 %v1555, %v1747
        %v1780 = vmul.f32 %v1556, %v1748
        %v1781 = vmul.f32 %v1557, %v1749
        %v1782 = vmul.f32 %v1558, %v1750
        %v1783 = vmul.f32 %v1559, %v1751
        %v1784 = vmul.f32 %v1560, %v1752
        %v1785 = vmul.f32 %v1561, %v1753
        %v1786 = vmul.f32 %v1562, %v1754
        %v1787 = vmul.f32 %v1563, %v1755
        %v1788 = vmul.f32 %v1564, %v1756
        %v1789 = vmul.f32 %v1565, %v1757
        %v1790 = vmul.f32 %v1566, %v1758
        %v1791 = vmul.f32 %v1567, %v1759
        %v1792 = vmul.f32 %v1568, %v1760
        %v1793 = vmul.f32 %v1569, %v1761
        %v1794 = vmul.f32 %v1570, %v1762
        %v1795 = vmul.f32 %v1571, %v1763
        %v1796 = vmul.f32 %v1572, %v1764
        %v1797 = vmul.f32 %v1573, %v1765
        %v1798 = vmul.f32 %v1574, %v1766
        %v1799 = vmul.f32 %v1575, %v1767
        %v1800 = vmul.f32 %v1576, %v1768
        %v1801 = vmul.f32 %v1577, %v1769
        %v1802 = vmul.f32 %v1578, %v1770
        %v1803 = vld [vmem:[%s2 + $0x1] sm:$0x1]
        %v1804 = vlaneseq
        %v1805 = vshrl.u32 %v1804, 7
        %v1806 = vsub.s32 0, %v1805
        %v1807 = vrot.slane %v1803, %v1806
        %v1808 = vmul.f32 %v1771, %v1807
        %v1809 = vmul.f32 %v1772, %v1807
        %v1810 = vmul.f32 %v1773, %v1807
        %v1811 = vmul.f32 %v1774, %v1807
        %v1812 = vmul.f32 %v1775, %v1807
        %v1813 = vmul.f32 %v1776, %v1807
        %v1814 = vmul.f32 %v1777, %v1807
        %v1815 = vmul.f32 %v1778, %v1807
        %v1816 = vmul.f32 %v1779, %v1807
        %v1817 = vmul.f32 %v1780, %v1807
        %v1818 = vmul.f32 %v1781, %v1807
        %v1819 = vmul.f32 %v1782, %v1807
        %v1820 = vmul.f32 %v1783, %v1807
        %v1821 = vmul.f32 %v1784, %v1807
        %v1822 = vmul.f32 %v1785, %v1807
        %v1823 = vmul.f32 %v1786, %v1807
        %v1824 = vmul.f32 %v1787, %v1807
        %v1825 = vmul.f32 %v1788, %v1807
        %v1826 = vmul.f32 %v1789, %v1807
        %v1827 = vmul.f32 %v1790, %v1807
        %v1828 = vmul.f32 %v1791, %v1807
        %v1829 = vmul.f32 %v1792, %v1807
        %v1830 = vmul.f32 %v1793, %v1807
        %v1831 = vmul.f32 %v1794, %v1807
        %v1832 = vmul.f32 %v1795, %v1807
        %v1833 = vmul.f32 %v1796, %v1807
        %v1834 = vmul.f32 %v1797, %v1807
        %v1835 = vmul.f32 %v1798, %v1807
        %v1836 = vmul.f32 %v1799, %v1807
        %v1837 = vmul.f32 %v1800, %v1807
        %v1838 = vmul.f32 %v1801, %v1807
        %v1839 = vmul.f32 %v1802, %v1807
        %v1840 = vld [vmem:[%s2 + $0x2] sm:$0x1]
        %v1841 = vlaneseq
        %v1842 = vshrl.u32 %v1841, 7
        %v1843 = vsub.s32 0, %v1842
        %v1844 = vrot.slane %v1840, %v1843
        %v1845 = vadd.f32 %v1808, %v1844
        %v1846 = vadd.f32 %v1809, %v1844
        %v1847 = vadd.f32 %v1810, %v1844
        %v1848 = vadd.f32 %v1811, %v1844
        %v1849 = vadd.f32 %v1812, %v1844
        %v1850 = vadd.f32 %v1813, %v1844
        %v1851 = vadd.f32 %v1814, %v1844
        %v1852 = vadd.f32 %v1815, %v1844
        %v1853 = vadd.f32 %v1816, %v1844
        %v1854 = vadd.f32 %v1817, %v1844
        %v1855 = vadd.f32 %v1818, %v1844
        %v1856 = vadd.f32 %v1819, %v1844
        %v1857 = vadd.f32 %v1820, %v1844
        %v1858 = vadd.f32 %v1821, %v1844
        %v1859 = vadd.f32 %v1822, %v1844
        %v1860 = vadd.f32 %v1823, %v1844
        %v1861 = vadd.f32 %v1824, %v1844
        %v1862 = vadd.f32 %v1825, %v1844
        %v1863 = vadd.f32 %v1826, %v1844
        %v1864 = vadd.f32 %v1827, %v1844
        %v1865 = vadd.f32 %v1828, %v1844
        %v1866 = vadd.f32 %v1829, %v1844
        %v1867 = vadd.f32 %v1830, %v1844
        %v1868 = vadd.f32 %v1831, %v1844
        %v1869 = vadd.f32 %v1832, %v1844
        %v1870 = vadd.f32 %v1833, %v1844
        %v1871 = vadd.f32 %v1834, %v1844
        %v1872 = vadd.f32 %v1835, %v1844
        %v1873 = vadd.f32 %v1836, %v1844
        %v1874 = vadd.f32 %v1837, %v1844
        %v1875 = vadd.f32 %v1838, %v1844
        %v1876 = vadd.f32 %v1839, %v1844
        %s1877 = scalar_lea.vmem [#allocation2], 24
        %1878 = vst [vmem:[%s1877 + $0x8] sm:$0xff] %v1845
        %1879 = vst [vmem:[%s1877 + $0x10] sm:$0xff] %v1846
        %1880 = vst [vmem:[%s1877 + $0x20] sm:$0xff] %v1847
        %1881 = vst [vmem:[%s1877 + $0x28] sm:$0xff] %v1848
        %1882 = vst [vmem:[%s1877 + $0x38] sm:$0xff] %v1849
        %1883 = vst [vmem:[%s1877 + $0x40] sm:$0xff] %v1850
        %1884 = vst [vmem:[%s1877 + $0x50] sm:$0xff] %v1851
        %1885 = vst [vmem:[%s1877 + $0x58] sm:$0xff] %v1852
        %1886 = vst [vmem:[%s1877 + $0x68] sm:$0xff] %v1853
        %1887 = vst [vmem:[%s1877 + $0x70] sm:$0xff] %v1854
        %1888 = vst [vmem:[%s1877 + $0x80] sm:$0xff] %v1855
        %1889 = vst [vmem:[%s1877 + $0x88] sm:$0xff] %v1856
        %1890 = vst [vmem:[%s1877 + $0x98] sm:$0xff] %v1857
        %1891 = vst [vmem:[%s1877 + $0xa0] sm:$0xff] %v1858
        %1892 = vst [vmem:[%s1877 + $0xb0] sm:$0xff] %v1859
        %1893 = vst [vmem:[%s1877 + $0xb8] sm:$0xff] %v1860
        %1894 = vst [vmem:[%s1877 + $0xc8] sm:$0xff] %v1861
        %1895 = vst [vmem:[%s1877 + $0xd0] sm:$0xff] %v1862
        %1896 = vst [vmem:[%s1877 + $0xe0] sm:$0xff] %v1863
        %1897 = vst [vmem:[%s1877 + $0xe8] sm:$0xff] %v1864
        %1898 = vst [vmem:[%s1877 + $0xf8] sm:$0xff] %v1865
        %1899 = vst [vmem:[%s1877 + $0x100] sm:$0xff] %v1866
        %1900 = vst [vmem:[%s1877 + $0x110] sm:$0xff] %v1867
        %1901 = vst [vmem:[%s1877 + $0x118] sm:$0xff] %v1868
        %1902 = vst [vmem:[%s1877 + $0x128] sm:$0xff] %v1869
        %1903 = vst [vmem:[%s1877 + $0x130] sm:$0xff] %v1870
        %1904 = vst [vmem:[%s1877 + $0x140] sm:$0xff] %v1871
        %1905 = vst [vmem:[%s1877 + $0x148] sm:$0xff] %v1872
        %1906 = vst [vmem:[%s1877 + $0x158] sm:$0xff] %v1873
        %1907 = vst [vmem:[%s1877 + $0x160] sm:$0xff] %v1874
        %1908 = vst [vmem:[%s1877 + $0x170] sm:$0xff] %v1875
        %1909 = vst [vmem:[%s1877 + $0x178] sm:$0xff] %v1876
        %s1910 = scalar_lea.vmem [#allocation2], 7
        %v1911 = vld [vmem:[%s1910] ss:$2 sm:$0xff]
        %s1912 = scalar_lea.vmem [#allocation2], 31
        %v1913 = vld [vmem:[%s1912] ss:$2 sm:$0xff]
        %s1914 = scalar_lea.vmem [#allocation2], 55
        %v1915 = vld [vmem:[%s1914] ss:$2 sm:$0xff]
        %s1916 = scalar_lea.vmem [#allocation2], 79
        %v1917 = vld [vmem:[%s1916] ss:$2 sm:$0xff]
        %s1918 = scalar_lea.vmem [#allocation2], 103
        %v1919 = vld [vmem:[%s1918] ss:$2 sm:$0xff]
        %s1920 = scalar_lea.vmem [#allocation2], 127
        %v1921 = vld [vmem:[%s1920] ss:$2 sm:$0xff]
        %s1922 = scalar_lea.vmem [#allocation2], 151
        %v1923 = vld [vmem:[%s1922] ss:$2 sm:$0xff]
        %s1924 = scalar_lea.vmem [#allocation2], 175
        %v1925 = vld [vmem:[%s1924] ss:$2 sm:$0xff]
        %s1926 = scalar_lea.vmem [#allocation2], 199
        %v1927 = vld [vmem:[%s1926] ss:$2 sm:$0xff]
        %s1928 = scalar_lea.vmem [#allocation2], 223
        %v1929 = vld [vmem:[%s1928] ss:$2 sm:$0xff]
        %s1930 = scalar_lea.vmem [#allocation2], 247
        %v1931 = vld [vmem:[%s1930] ss:$2 sm:$0xff]
        %s1932 = scalar_lea.vmem [#allocation2], 271
        %v1933 = vld [vmem:[%s1932] ss:$2 sm:$0xff]
        %s1934 = scalar_lea.vmem [#allocation2], 295
        %v1935 = vld [vmem:[%s1934] ss:$2 sm:$0xff]
        %s1936 = scalar_lea.vmem [#allocation2], 319
        %v1937 = vld [vmem:[%s1936] ss:$2 sm:$0xff]
        %s1938 = scalar_lea.vmem [#allocation2], 343
        %v1939 = vld [vmem:[%s1938] ss:$2 sm:$0xff]
        %s1940 = scalar_lea.vmem [#allocation2], 367
        %v1941 = vld [vmem:[%s1940] ss:$2 sm:$0xff]
        %s1942 = scalar_lea.vmem [#allocation2], 391
        %v1943 = vld [vmem:[%s1942] ss:$2 sm:$0xff]
        %s1944 = scalar_lea.vmem [#allocation2], 8
        %v1945 = vld [vmem:[%s1944] ss:$2 sm:$0xff]
        %s1946 = scalar_lea.vmem [#allocation2], 32
        %v1947 = vld [vmem:[%s1946] ss:$2 sm:$0xff]
        %s1948 = scalar_lea.vmem [#allocation2], 56
        %v1949 = vld [vmem:[%s1948] ss:$2 sm:$0xff]
        %s1950 = scalar_lea.vmem [#allocation2], 80
        %v1951 = vld [vmem:[%s1950] ss:$2 sm:$0xff]
        %s1952 = scalar_lea.vmem [#allocation2], 104
        %v1953 = vld [vmem:[%s1952] ss:$2 sm:$0xff]
        %s1954 = scalar_lea.vmem [#allocation2], 128
        %v1955 = vld [vmem:[%s1954] ss:$2 sm:$0xff]
        %s1956 = scalar_lea.vmem [#allocation2], 152
        %v1957 = vld [vmem:[%s1956] ss:$2 sm:$0xff]
        %s1958 = scalar_lea.vmem [#allocation2], 176
        %v1959 = vld [vmem:[%s1958] ss:$2 sm:$0xff]
        %s1960 = scalar_lea.vmem [#allocation2], 200
        %v1961 = vld [vmem:[%s1960] ss:$2 sm:$0xff]
        %s1962 = scalar_lea.vmem [#allocation2], 224
        %v1963 = vld [vmem:[%s1962] ss:$2 sm:$0xff]
        %s1964 = scalar_lea.vmem [#allocation2], 248
        %v1965 = vld [vmem:[%s1964] ss:$2 sm:$0xff]
        %s1966 = scalar_lea.vmem [#allocation2], 272
        %v1967 = vld [vmem:[%s1966] ss:$2 sm:$0xff]
        %s1968 = scalar_lea.vmem [#allocation2], 296
        %v1969 = vld [vmem:[%s1968] ss:$2 sm:$0xff]
        %s1970 = scalar_lea.vmem [#allocation2], 320
        %v1971 = vld [vmem:[%s1970] ss:$2 sm:$0xff]
        %s1972 = scalar_lea.vmem [#allocation2], 344
        %v1973 = vld [vmem:[%s1972] ss:$2 sm:$0xff]
        %s1974 = scalar_lea.vmem [#allocation2], 368
        %v1975 = vld [vmem:[%s1974] ss:$2 sm:$0xff]
        %s1976 = scalar_lea.vmem [#allocation2], 392
        %v1977 = vld [vmem:[%s1976] ss:$2 sm:$0xff]
        %s1978 = scalar_lea.vmem [#allocation2], 9
        %v1979 = vld [vmem:[%s1978] ss:$2 sm:$0xff]
        %s1980 = scalar_lea.vmem [#allocation2], 33
        %v1981 = vld [vmem:[%s1980] ss:$2 sm:$0xff]
        %s1982 = scalar_lea.vmem [#allocation2], 57
        %v1983 = vld [vmem:[%s1982] ss:$2 sm:$0xff]
        %s1984 = scalar_lea.vmem [#allocation2], 81
        %v1985 = vld [vmem:[%s1984] ss:$2 sm:$0xff]
        %s1986 = scalar_lea.vmem [#allocation2], 105
        %v1987 = vld [vmem:[%s1986] ss:$2 sm:$0xff]
        %s1988 = scalar_lea.vmem [#allocation2], 129
        %v1989 = vld [vmem:[%s1988] ss:$2 sm:$0xff]
        %s1990 = scalar_lea.vmem [#allocation2], 153
        %v1991 = vld [vmem:[%s1990] ss:$2 sm:$0xff]
        %s1992 = scalar_lea.vmem [#allocation2], 177
        %v1993 = vld [vmem:[%s1992] ss:$2 sm:$0xff]
        %s1994 = scalar_lea.vmem [#allocation2], 201
        %v1995 = vld [vmem:[%s1994] ss:$2 sm:$0xff]
        %s1996 = scalar_lea.vmem [#allocation2], 225
        %v1997 = vld [vmem:[%s1996] ss:$2 sm:$0xff]
        %s1998 = scalar_lea.vmem [#allocation2], 249
        %v1999 = vld [vmem:[%s1998] ss:$2 sm:$0xff]
        %s2000 = scalar_lea.vmem [#allocation2], 273
        %v2001 = vld [vmem:[%s2000] ss:$2 sm:$0xff]
        %s2002 = scalar_lea.vmem [#allocation2], 297
        %v2003 = vld [vmem:[%s2002] ss:$2 sm:$0xff]
        %s2004 = scalar_lea.vmem [#allocation2], 321
        %v2005 = vld [vmem:[%s2004] ss:$2 sm:$0xff]
        %s2006 = scalar_lea.vmem [#allocation2], 345
        %v2007 = vld [vmem:[%s2006] ss:$2 sm:$0xff]
        %s2008 = scalar_lea.vmem [#allocation2], 369
        %v2009 = vld [vmem:[%s2008] ss:$2 sm:$0xff]
        %s2010 = scalar_lea.vmem [#allocation2], 393
        %v2011 = vld [vmem:[%s2010] ss:$2 sm:$0xff]
        %v2012 = vmax.f32 %v1911, %v1945
        %v2013 = vmax.f32 %v1913, %v1947
        %v2014 = vmax.f32 %v1915, %v1949
        %v2015 = vmax.f32 %v1917, %v1951
        %v2016 = vmax.f32 %v1919, %v1953
        %v2017 = vmax.f32 %v1921, %v1955
        %v2018 = vmax.f32 %v1923, %v1957
        %v2019 = vmax.f32 %v1925, %v1959
        %v2020 = vmax.f32 %v1927, %v1961
        %v2021 = vmax.f32 %v1929, %v1963
        %v2022 = vmax.f32 %v1931, %v1965
        %v2023 = vmax.f32 %v1933, %v1967
        %v2024 = vmax.f32 %v1935, %v1969
        %v2025 = vmax.f32 %v1937, %v1971
        %v2026 = vmax.f32 %v1939, %v1973
        %v2027 = vmax.f32 %v1941, %v1975
        %v2028 = vmax.f32 %v1943, %v1977
        %v2029 = vmax.f32 %v2012, %v1979
        %v2030 = vmax.f32 %v2013, %v1981
        %v2031 = vmax.f32 %v2014, %v1983
        %v2032 = vmax.f32 %v2015, %v1985
        %v2033 = vmax.f32 %v2016, %v1987
        %v2034 = vmax.f32 %v2017, %v1989
        %v2035 = vmax.f32 %v2018, %v1991
        %v2036 = vmax.f32 %v2019, %v1993
        %v2037 = vmax.f32 %v2020, %v1995
        %v2038 = vmax.f32 %v2021, %v1997
        %v2039 = vmax.f32 %v2022, %v1999
        %v2040 = vmax.f32 %v2023, %v2001
        %v2041 = vmax.f32 %v2024, %v2003
        %v2042 = vmax.f32 %v2025, %v2005
        %v2043 = vmax.f32 %v2026, %v2007
        %v2044 = vmax.f32 %v2027, %v2009
        %v2045 = vmax.f32 %v2028, %v2011
        %v2046 = vmax.f32 %v2029, %v2030
        %v2047 = vmax.f32 %v2031, %v2032
        %v2048 = vmax.f32 %v2033, %v2034
        %v2049 = vmax.f32 %v2035, %v2036
        %v2050 = vmax.f32 %v2037, %v2038
        %v2051 = vmax.f32 %v2039, %v2040
        %v2052 = vmax.f32 %v2041, %v2042
        %v2053 = vmax.f32 %v2043, %v2044
        %v2054 = vmax.f32 %v2046, %v2031
        %v2055 = vmax.f32 %v2047, %v2033
        %v2056 = vmax.f32 %v2048, %v2035
        %v2057 = vmax.f32 %v2049, %v2037
        %v2058 = vmax.f32 %v2050, %v2039
        %v2059 = vmax.f32 %v2051, %v2041
        %v2060 = vmax.f32 %v2052, %v2043
        %v2061 = vmax.f32 %v2053, %v2045
        %2062 = vst [vmem:[%s190] sm:$0xff] %v2054
        %2063 = vst [vmem:[%s190 + $0x8] sm:$0xff] %v2055
        %2064 = vst [vmem:[%s190 + $0x10] sm:$0xff] %v2056
        %2065 = vst [vmem:[%s190 + $0x18] sm:$0xff] %v2057
        %2066 = vst [vmem:[%s190 + $0x20] sm:$0xff] %v2058
        %2067 = vst [vmem:[%s190 + $0x28] sm:$0xff] %v2059
        %2068 = vst [vmem:[%s190 + $0x30] sm:$0xff] %v2060
        %2069 = vst [vmem:[%s190 + $0x38] sm:$0xff] %v2061
        %s2070 = sand.u32 %s109, 1
        %s2071 = scalar_lea.sflag [#allocation4], %s2070
        %s2072 = sand.u32 %s109, 1
        %s2073 = smul.addr %s2072, 64
        %s2074 = scalar_lea.vmem [#allocation3], %s2073
        // Predicated region
        $region41: #{tpu_custom_call.1} parent=31 // pred_check
          %p2075 = pneg %p119
        $region42: #{tpu_custom_call.1} parent=31 // pred_check_branch
          %2077 = sbr.rel (%p2075) target = $region44
        $region43: #{tpu_custom_call.1} parent=31 // pred_region
          %s2078 = smul.u32 8, %s22
          %s2080 = ssub.s32 1024, 1024
          %2081 = vsyncadd %s2071, %s2080
          %s2082 = smul.addr %s21, 8
          %s2083 = sadd.s32 %s2078, %s2082
          %s2084 = smul.addr %s2083, 128
          %s2085 = scalar_lea.hbm %s3, %s2084
          %s2086 = sshll.u32 %s2074, 4
          %s2087 = int_to_ptr.vmem [resolvable:$true] %s2086
          %2092 = dma.vmem_to_hbm [thread:$0]  %s2087, 1024, %s2085, %s2071, 128, 128, 8
        $region44: #{tpu_custom_call.1} parent=31 // pred_fallthru
          _
      $region32: #{tpu_custom_call.1} parent=5 // pred_fallthru
        _
      %p2093 = scmp.le.s32.totalorder 2, %s12
      // Predicated region
      $region45: #{tpu_custom_call.1} parent=5 // pred_check
        %p2094 = pneg %p2093
      $region46: #{tpu_custom_call.1} parent=5 // pred_check_branch
        %2096 = sbr.rel (%p2094) target = $region48
      $region47: #{tpu_custom_call.1} parent=5 // pred_region
        %s2097 = ssub.s32 %s12, 2
        // Predicated region
        $region49: #{tpu_custom_call.1} parent=47 // pred_check
          %p2098 = pneg %p125
        $region50: #{tpu_custom_call.1} parent=47 // pred_check_branch
          %2100 = sbr.rel (%p2098) target = $region52
        $region51: #{tpu_custom_call.1} parent=47 // pred_region
          %s2101 = sand.u32 %s110, 1
          %s2102 = scalar_lea.sflag [#allocation4], %s2101
          %s2103 = sand.u32 %s110, 1
          %s2104 = smul.addr %s2103, 64
          %s2105 = scalar_lea.vmem [#allocation3], %s2104
          %2106 = dma.done %s2102, 1024
        $region52: #{tpu_custom_call.1} parent=47 // pred_fallthru
          _
      $region48: #{tpu_custom_call.1} parent=5 // pred_fallthru
        _
    $region6: #{tpu_custom_call.1} parent=1 // loop_footer
      %s16 = sadd.s32 1, %s12
    $region7: #{tpu_custom_call.1} parent=1 // loop_footer_branch
      %11 = sbr.rel target = $region3
    $region8: #{tpu_custom_call.1} parent=1 // loop_exit
      _
    %2107 = vsyncpa [#allocation4], 1
    %s2108 = scalar_lea.sflag [#allocation4], 1
    %2109 = vsyncpa %s2108, 1

</llo_original>
